<compile_context>
chip_gen: v7x
topology: tpu7x:2x2x1
jax: 0.10.0
libtpu: 0.0.40
codegen_flags: <defaults>
</compile_context>

<pallas_src>
from functools import partial

import jax
import jax.numpy as jnp
import numpy as np
from jax.experimental import pallas as pl
from jax.experimental.pallas import tpu as pltpu

LANE = 128
SUB = 8


def _round_up(x, m):
    return (x + m - 1) // m * m


# ---------------------------------------------------------------------------
# Kernel
# ---------------------------------------------------------------------------
def crfa_kernel(feat_ref,   # VMEM (Bb, S+Sc, Ep) compute dtype  fused text|cpt slab
                scale_ref,  # SMEM (2,) f32   [W_word_2, W_word_cpt]
                ww_ref,     # VMEM (1, Ep) f32   word attention weight
                cw_ref,     # VMEM (1, Ep) f32   concept attention weight
                convw_ref,  # VMEM (Ep, Ep) compute dtype  conv1d(k=1) weight (in, out)
                convb_ref,  # VMEM (1, Ep) f32   conv bias
                fcw_ref,    # VMEM (6*Ep, Op) compute dtype  fc weight (concat layout)
                fcb_ref,    # VMEM (1, Op) f32   fc bias
                out_ref,    # VMEM (Bb, Op) f32  logits (lane-dense, padded)
                *, s_text):
    Bb, L, Ep = feat_ref.shape
    S = s_text                           # static split point text | concept
    cdt = feat_ref.dtype

    convw = convw_ref[...]
    convb = convb_ref[...]               # (1, Ep) broadcasts over rows
    ww = ww_ref[...].reshape(1, 1, Ep)
    cw = cw_ref[...].reshape(1, 1, Ep)
    s_word = scale_ref[0]                # SMEM scalars (any sign is exact)
    s_cpt = scale_ref[1]

    def conv1(flat_cdt):                 # (Bb*L, Ep) cdt -> (Bb*L, Ep) f32, ReLU'd
        y = jnp.dot(flat_cdt, convw, preferred_element_type=jnp.float32) + convb
        return jnp.maximum(y, 0.0)

    def attention(feat_f32, w_row, scale):
        # feat (Bb, Lb, Ep) f32.  Scores stay lane-dense 2-D (Bb, Lb); the
        # softmax normalization is a single multiply of the weighted sum by an
        # approximate reciprocal (EUP slot), not a per-position divide.
        u = jnp.maximum(jnp.sum(feat_f32 * w_row, axis=-1), 0.0) * scale   # (Bb, Lb)
        m = jnp.max(u, axis=-1, keepdims=True)                             # (Bb, 1)
        p = jnp.exp(u - m)                                                 # (Bb, Lb)
        denom = jnp.sum(p, axis=-1, keepdims=True)                         # (Bb, 1)
        weighted = jnp.sum(p[:, :, None] * feat_f32, axis=1)               # (Bb, Ep)
        return weighted * pl.reciprocal(denom, approx=True)

    def both(feat_f32):                  # text rows [:S], concept rows [S:]
        return (attention(feat_f32[:, :S, :], ww, s_word),
                attention(feat_f32[:, S:, :], cw, s_cpt))

    # level 0 -----------------------------------------------------------------
    feat0 = feat_ref[...]                                    # (Bb, L, Ep) cdt
    feat0_f32 = feat0.astype(jnp.float32)
    t0, c0 = both(feat0_f32)

    # level 1: one fused conv matmul over both branches ------------------------
    feat1_f32 = conv1(feat0.reshape(Bb * L, Ep)).reshape(Bb, L, Ep)
    t1, c1 = both(feat1_f32)

    # level 2 -----------------------------------------------------------------
    feat2_f32 = conv1(feat1_f32.astype(cdt).reshape(Bb * L, Ep)).reshape(Bb, L, Ep)
    t2, c2 = both(feat2_f32)

    # final fc: lane-concat the six attention vectors (each Ep % 128 == 0) and
    # run ONE long-K matmul against the concat-layout weight.
    A = jnp.concatenate([v.astype(cdt) for v in (t0, t1, t2, c0, c1, c2)], axis=-1)
    out_ref[...] = (jnp.dot(A, fcw_ref[...], preferred_element_type=jnp.float32)
                    + fcb_ref[...])


# ---------------------------------------------------------------------------
# Parameter preparation (padding / dtype / layout) shared by kernel & reference
# ---------------------------------------------------------------------------
def prepare_operands(params, compute_dtype=jnp.bfloat16):
    E = params["word_weight"].shape[0]
    O = params["fc_w_t"].shape[-1]
    Ep = _round_up(E, LANE)
    Op = _round_up(O, LANE)

    def pad_last(a, target):
        pad = target - a.shape[-1]
        if pad == 0:
            return a
        return jnp.pad(a, [(0, 0)] * (a.ndim - 1) + [(0, pad)])

    # Combined embedding table (text vocab first, then concept vocab) so a
    # single gather with offset concept ids yields the fused activation slab.
    txt_vocab = params["word_embed"].shape[0]
    embed_tbl = jnp.concatenate(
        [pad_last(params["word_embed"], Ep),
         pad_last(params["cpt_embed"], Ep)], axis=0).astype(compute_dtype)

    ww = pad_last(params["word_weight"][:, 0][None, :], Ep).astype(jnp.float32)
    cw = pad_last(params["cpt_weight"][:, 0][None, :], Ep).astype(jnp.float32)
    # W_word_2 / W_word_cpt are applied post-ReLU inside the kernel via SMEM
    # scalars (exact for any sign; no fold -> no trained-checkpoint hazard).
    scales = jnp.stack([params["W_word_2"][0, 0],
                        params["W_word_cpt"][0, 0]]).astype(jnp.float32)

    convw = jnp.zeros((Ep, Ep), compute_dtype).at[:E, :E].set(
        params["conv_w_t"].astype(compute_dtype))
    convb = pad_last(params["conv_b"].astype(jnp.float32), Ep)        # (1, Ep)

    # fc weight laid out for the lane-concatenated attention vector: (6*Ep, Op)
    fcw = (jnp.zeros((6, Ep, Op), compute_dtype)
           .at[:, :E, :O].set(params["fc_w_t"].reshape(6, E, O).astype(compute_dtype))
           .reshape(6 * Ep, Op))
    fcb = pad_last(params["fc_b"].astype(jnp.float32), Op)            # (1, Op)

    return dict(embed_tbl=embed_tbl, txt_vocab=txt_vocab, ww=ww, cw=cw,
                scales=scales, convw=convw, convb=convb, fcw=fcw, fcb=fcb,
                E=E, O=O, Ep=Ep, Op=Op)


# ---------------------------------------------------------------------------
# Wrapper
# ---------------------------------------------------------------------------
def crfa_forward(x_ids, cpt_ids, params, compute_dtype=jnp.bfloat16):
    ops = prepare_operands(params, compute_dtype)
    Ep, Op = ops["Ep"], ops["Op"]
    B, S = x_ids.shape
    Sc = cpt_ids.shape[1]
    L = S + Sc

    # Single fused embedding gather producing the (B, S+Sc, Ep) slab the kernel
    # consumes (no per-branch gathers or activation concats in HBM).
    # TODO(synk): moving the gather itself into the kernel (scalar-prefetched
    # ids + double-buffered per-row DMA from HBM tables) would remove the last
    # HBM round trip of the gathered slab; omitted to keep the kernel robust.
    ids_all = jnp.concatenate([x_ids, cpt_ids + ops["txt_vocab"]], axis=1)
    feat = ops["embed_tbl"][ids_all]                       # (B, L, Ep) cdt

    # --- batch blocking ------------------------------------------------------
    # Target ~2048 fused rows (Bb*(S+Sc)) per conv matmul to amortize the
    # ~0.35 us per-grid-step cost; for non-trivial B keep >= 2 grid steps so
    # the "parallel" axis shards across v7x's two TensorCores (single-TC
    # v5e/v6e unaffected).  Small B stays a single full block (kept 8-aligned
    # by the "block == full dim" rule).
    if B <= SUB:
        Bb, B_pad = B, B
    else:
        cap_b = max(SUB, (2048 // max(L, 1)) // SUB * SUB)
        B8 = _round_up(B, SUB)
        half = max(SUB, (B8 // 2) // SUB * SUB)
        Bb = min(cap_b, half)
        B_pad = _round_up(B, Bb)
    if B_pad != B:
        feat = jnp.concatenate(
            [feat, jnp.zeros((B_pad - B, L, Ep), feat.dtype)], axis=0)

    # Scoped-VMEM budget: weights + double-buffered input block + f32
    # intermediate headroom (defaults are only 16 MiB on v5e / 32 MiB v6e/v7x).
    itemsize = jnp.dtype(compute_dtype).itemsize
    act_block = Bb * L * Ep
    est = (Ep * Ep + 6 * Ep * Op) * itemsize               # matmul weights
    est += 2 * 2 * act_block * itemsize                    # double-buffered input
    est += 6 * act_block * 4                               # live f32 intermediates
    est += 2 << 20
    vmem_limit = int(min(max(est, 32 << 20), 64 << 20))

    out = pl.pallas_call(
        partial(crfa_kernel, s_text=S),
        out_shape=jax.ShapeDtypeStruct((B_pad, Op), jnp.float32),
        grid=(B_pad // Bb,),
        in_specs=[
            pl.BlockSpec((Bb, L, Ep), lambda b: (b, 0, 0)),           # fused slab
            pl.BlockSpec(memory_space=pltpu.MemorySpace.SMEM),        # attn scales
            pl.BlockSpec((1, Ep), lambda b: (0, 0)),                  # word attn w
            pl.BlockSpec((1, Ep), lambda b: (0, 0)),                  # cpt attn w
            pl.BlockSpec((Ep, Ep), lambda b: (0, 0)),                 # conv weight
            pl.BlockSpec((1, Ep), lambda b: (0, 0)),                  # conv bias
            pl.BlockSpec((6 * Ep, Op), lambda b: (0, 0)),             # fc weight
            pl.BlockSpec((1, Op), lambda b: (0, 0)),                  # fc bias
        ],
        out_specs=pl.BlockSpec((Bb, Op), lambda b: (b, 0)),           # lane-dense
        compiler_params=pltpu.CompilerParams(
            dimension_semantics=("parallel",),
            vmem_limit_bytes=vmem_limit),
    )(feat, ops["scales"], ops["ww"], ops["cw"],
      ops["convw"], ops["convb"], ops["fcw"], ops["fcb"])

    return out[:B, :ops["O"]]


# ---------------------------------------------------------------------------
# Pure-JAX reference with the same data path (padding / bf16 casts) for check
# ---------------------------------------------------------------------------
def ref_forward(x_ids, cpt_ids, params, compute_dtype=jnp.bfloat16):
    ops = prepare_operands(params, compute_dtype)
    cdt = compute_dtype
    Ep = ops["Ep"]
    S = x_ids.shape[1]

    ids_all = jnp.concatenate([x_ids, cpt_ids + ops["txt_vocab"]], axis=1)
    feat0 = ops["embed_tbl"][ids_all]                      # (B, L, Ep) cdt
    convw, convb = ops["convw"], ops["convb"]

    def conv1(f_cdt):                                      # (B, L, Ep) cdt -> f32
        y = jnp.einsum("ble,eo->blo", f_cdt, convw,
                       preferred_element_type=jnp.float32) + convb[0]
        return jnp.maximum(y, 0.0)

    def attention(f32, w, scale):
        u = jnp.maximum(jnp.sum(f32 * w.reshape(1, 1, Ep), axis=-1), 0.0) * scale
        m = jnp.max(u, axis=-1, keepdims=True)
        p = jnp.exp(u - m)
        denom = jnp.sum(p, axis=-1, keepdims=True)
        return jnp.sum(p[:, :, None] * f32, axis=1) / denom

    def both(f32):
        return (attention(f32[:, :S, :], ops["ww"], ops["scales"][0]),
                attention(f32[:, S:, :], ops["cw"], ops["scales"][1]))

    f0_f32 = feat0.astype(jnp.float32)
    t0, c0 = both(f0_f32)
    f1_f32 = conv1(feat0)
    t1, c1 = both(f1_f32)
    f2_f32 = conv1(f1_f32.astype(cdt))
    t2, c2 = both(f2_f32)

    A = jnp.concatenate([v.astype(cdt) for v in (t0, t1, t2, c0, c1, c2)], axis=-1)
    logits = jnp.dot(A, ops["fcw"], preferred_element_type=jnp.float32) + ops["fcb"]
    return logits[:, :ops["O"]]


if __name__ == "__main__":
    # Small deterministic configuration (real model uses E=300 -> fc in = 1800).
    B, S, Sc = 2, 8, 8
    E = 32                 # embedding_dim
    O = 5                  # output_size
    V_TXT, V_CPT = 50, 40  # vocab sizes

    key = jax.random.PRNGKey(0)
    ks = jax.random.split(key, 12)

    params = {
        "word_embed": jax.random.normal(ks[0], (V_TXT, E), jnp.float32) * 0.1,
        "cpt_embed":  jax.random.normal(ks[1], (V_CPT, E), jnp.float32) * 0.1,
        "word_weight": jax.random.uniform(ks[2], (E, 1), jnp.float32),   # torch.rand
        "cpt_weight":  jax.random.uniform(ks[3], (E, 1), jnp.float32),
        "W_word_2":    jax.random.uniform(ks[4], (1, 1), jnp.float32),
        "W_word_cpt":  jax.random.uniform(ks[5], (1, 1), jnp.float32),
        # con1: last nn.Conv1d(E, E, k=1) weight stored (in, out), bias (1, E)
        "conv_w_t": jax.random.normal(ks[6], (E, E), jnp.float32) * (1.0 / np.sqrt(E)),
        "conv_b":   jax.random.normal(ks[7], (1, E), jnp.float32) * 0.05,
        # fc: Linear(6E, O) weight stored (in, out), bias (1, O)
        "fc_w_t": jax.random.normal(ks[8], (6 * E, O), jnp.float32) * (1.0 / np.sqrt(6 * E)),
        "fc_b":   jax.random.normal(ks[9], (1, O), jnp.float32) * 0.05,
    }

    x_ids = jax.random.randint(ks[10], (B, S), 0, V_TXT)
    cpt_ids = jax.random.randint(ks[11], (B, Sc), 0, V_CPT)

    # TODO(synk): dropout is identity (eval mode); training-mode dropout would
    # need pltpu.prng_* inside the kernel.
    logits = jax.block_until_ready(crfa_forward(x_ids, cpt_ids, params))
    ref = jax.block_until_ready(ref_forward(x_ids, cpt_ids, params))
    np.testing.assert_allclose(np.asarray(logits), np.asarray(ref),
                               rtol=5e-3, atol=5e-3)
    print("KERNEL_OK")
</pallas_src>

<mosaic_0001>
module attributes {stable_mosaic.version = 11 : i64} {
  func.func @crfa_kernel(%arg0: i32, %arg1: memref<2x16x128xbf16, #tpu.memory_space<vmem>>, %arg2: memref<2xf32, #tpu.memory_space<smem>>, %arg3: memref<1x128xf32, #tpu.memory_space<vmem>>, %arg4: memref<1x128xf32, #tpu.memory_space<vmem>>, %arg5: memref<128x128xbf16, #tpu.memory_space<vmem>>, %arg6: memref<1x128xf32, #tpu.memory_space<vmem>>, %arg7: memref<768x128xbf16, #tpu.memory_space<vmem>>, %arg8: memref<1x128xf32, #tpu.memory_space<vmem>>, %arg9: memref<2x128xf32, #tpu.memory_space<vmem>>) attributes {dimension_semantics = [#tpu.dimension_semantics<parallel>], iteration_bounds = array<i64: 1>, scalar_prefetch = 0 : i64, scratch_operands = 0 : i64, tpu.core_type = #tpu.core_type<tc>, window_params = [{transform_indices = @transform_0, window_bounds = array<i64: 2, 16, 128>}, {transform_indices = @transform_1, window_bounds = array<i64: 2>}, {pipeline_mode = #tpu.pipeline_mode<synchronous>, transform_indices = @transform_2, window_bounds = array<i64: 1, 128>}, {pipeline_mode = #tpu.pipeline_mode<synchronous>, transform_indices = @transform_3, window_bounds = array<i64: 1, 128>}, {pipeline_mode = #tpu.pipeline_mode<synchronous>, transform_indices = @transform_4, window_bounds = array<i64: 128, 128>}, {pipeline_mode = #tpu.pipeline_mode<synchronous>, transform_indices = @transform_5, window_bounds = array<i64: 1, 128>}, {pipeline_mode = #tpu.pipeline_mode<synchronous>, transform_indices = @transform_6, window_bounds = array<i64: 768, 128>}, {pipeline_mode = #tpu.pipeline_mode<synchronous>, transform_indices = @transform_7, window_bounds = array<i64: 1, 128>}, {transform_indices = @transform_8, window_bounds = array<i64: 2, 128>}]} {
    %c0 = arith.constant 0 : index
    %c0_0 = arith.constant 0 : index
    %0 = vector.load %arg5[%c0, %c0_0] : memref<128x128xbf16, #tpu.memory_space<vmem>>, vector<128x128xbf16>
    %c0_1 = arith.constant 0 : index
    %c0_2 = arith.constant 0 : index
    %1 = vector.load %arg6[%c0_1, %c0_2] : memref<1x128xf32, #tpu.memory_space<vmem>>, vector<1x128xf32>
    %c0_3 = arith.constant 0 : index
    %c0_4 = arith.constant 0 : index
    %2 = vector.load %arg3[%c0_3, %c0_4] : memref<1x128xf32, #tpu.memory_space<vmem>>, vector<1x128xf32>
    %3 = vector.shape_cast %2 : vector<1x128xf32> to vector<1x1x128xf32>
    %c0_5 = arith.constant 0 : index
    %c0_6 = arith.constant 0 : index
    %4 = vector.load %arg4[%c0_5, %c0_6] : memref<1x128xf32, #tpu.memory_space<vmem>>, vector<1x128xf32>
    %5 = vector.shape_cast %4 : vector<1x128xf32> to vector<1x1x128xf32>
    %c0_7 = arith.constant 0 : index
    %6 = memref.load %arg2[%c0_7] : memref<2xf32, #tpu.memory_space<smem>>
    %c1 = arith.constant 1 : index
    %7 = memref.load %arg2[%c1] : memref<2xf32, #tpu.memory_space<smem>>
    %c0_8 = arith.constant 0 : index
    %c0_9 = arith.constant 0 : index
    %c0_10 = arith.constant 0 : index
    %8 = vector.load %arg1[%c0_8, %c0_9, %c0_10] : memref<2x16x128xbf16, #tpu.memory_space<vmem>>, vector<2x16x128xbf16>
    %9 = arith.extf %8 : vector<2x16x128xbf16> to vector<2x16x128xf32>
    %10 = vector.extract_strided_slice %9 {offsets = [0, 0, 0], sizes = [2, 8, 128], strides = [1, 1, 1]} : vector<2x16x128xf32> to vector<2x8x128xf32>
    %11 = vector.broadcast %3 : vector<1x1x128xf32> to vector<2x8x128xf32>
    %12 = arith.mulf %10, %11 : vector<2x8x128xf32>
    %cst = arith.constant dense<0.000000e+00> : vector<2x8xf32>
    %13 = vector.multi_reduction <add>, %12, %cst [2] : vector<2x8x128xf32> to vector<2x8xf32>
    %cst_11 = arith.constant 0.000000e+00 : f32
    %14 = vector.broadcast %cst_11 : f32 to vector<2x8xf32>
    %15 = arith.maximumf %13, %14 : vector<2x8xf32>
    %16 = vector.broadcast %6 : f32 to vector<2x8xf32>
    %17 = arith.mulf %15, %16 : vector<2x8xf32>
    %cst_12 = arith.constant dense<0xFF800000> : vector<2xf32>
    %18 = vector.multi_reduction <maximumf>, %17, %cst_12 [1] : vector<2x8xf32> to vector<2xf32>
    %19 = vector.shape_cast %18 : vector<2xf32> to vector<2x1xf32>
    %20 = vector.broadcast %19 : vector<2x1xf32> to vector<2x8xf32>
    %21 = arith.subf %17, %20 : vector<2x8xf32>
    %22 = math.exp %21 : vector<2x8xf32>
    %cst_13 = arith.constant dense<0.000000e+00> : vector<2xf32>
    %23 = vector.multi_reduction <add>, %22, %cst_13 [1] : vector<2x8xf32> to vector<2xf32>
    %24 = vector.shape_cast %23 : vector<2xf32> to vector<2x1xf32>
    %25 = vector.shape_cast %22 : vector<2x8xf32> to vector<2x8x1xf32>
    %26 = vector.broadcast %25 : vector<2x8x1xf32> to vector<2x8x128xf32>
    %27 = arith.mulf %26, %10 : vector<2x8x128xf32>
    %cst_14 = arith.constant dense<0.000000e+00> : vector<2x128xf32>
    %28 = vector.multi_reduction <add>, %27, %cst_14 [1] : vector<2x8x128xf32> to vector<2x128xf32>
    %29 = tpu.reciprocal %24 {approx = true} : vector<2x1xf32> -> vector<2x1xf32>
    %30 = vector.broadcast %29 : vector<2x1xf32> to vector<2x128xf32>
    %31 = arith.mulf %28, %30 : vector<2x128xf32>
    %32 = vector.extract_strided_slice %9 {offsets = [0, 8, 0], sizes = [2, 8, 128], strides = [1, 1, 1]} : vector<2x16x128xf32> to vector<2x8x128xf32>
    %33 = vector.broadcast %5 : vector<1x1x128xf32> to vector<2x8x128xf32>
    %34 = arith.mulf %32, %33 : vector<2x8x128xf32>
    %cst_15 = arith.constant dense<0.000000e+00> : vector<2x8xf32>
    %35 = vector.multi_reduction <add>, %34, %cst_15 [2] : vector<2x8x128xf32> to vector<2x8xf32>
    %cst_16 = arith.constant 0.000000e+00 : f32
    %36 = vector.broadcast %cst_16 : f32 to vector<2x8xf32>
    %37 = arith.maximumf %35, %36 : vector<2x8xf32>
    %38 = vector.broadcast %7 : f32 to vector<2x8xf32>
    %39 = arith.mulf %37, %38 : vector<2x8xf32>
    %cst_17 = arith.constant dense<0xFF800000> : vector<2xf32>
    %40 = vector.multi_reduction <maximumf>, %39, %cst_17 [1] : vector<2x8xf32> to vector<2xf32>
    %41 = vector.shape_cast %40 : vector<2xf32> to vector<2x1xf32>
    %42 = vector.broadcast %41 : vector<2x1xf32> to vector<2x8xf32>
    %43 = arith.subf %39, %42 : vector<2x8xf32>
    %44 = math.exp %43 : vector<2x8xf32>
    %cst_18 = arith.constant dense<0.000000e+00> : vector<2xf32>
    %45 = vector.multi_reduction <add>, %44, %cst_18 [1] : vector<2x8xf32> to vector<2xf32>
    %46 = vector.shape_cast %45 : vector<2xf32> to vector<2x1xf32>
    %47 = vector.shape_cast %44 : vector<2x8xf32> to vector<2x8x1xf32>
    %48 = vector.broadcast %47 : vector<2x8x1xf32> to vector<2x8x128xf32>
    %49 = arith.mulf %48, %32 : vector<2x8x128xf32>
    %cst_19 = arith.constant dense<0.000000e+00> : vector<2x128xf32>
    %50 = vector.multi_reduction <add>, %49, %cst_19 [1] : vector<2x8x128xf32> to vector<2x128xf32>
    %51 = tpu.reciprocal %46 {approx = true} : vector<2x1xf32> -> vector<2x1xf32>
    %52 = vector.broadcast %51 : vector<2x1xf32> to vector<2x128xf32>
    %53 = arith.mulf %50, %52 : vector<2x128xf32>
    %54 = vector.shape_cast %8 : vector<2x16x128xbf16> to vector<32x128xbf16>
    %cst_20 = arith.constant dense<0.000000e+00> : vector<32x128xf32>
    %55 = tpu.matmul %54, %0, %cst_20 {dimension_numbers = #tpu.dot_dimension_numbers<[1], [0], [0], [1], [0, 0, 1, 1], [], []>} : vector<32x128xbf16>, vector<128x128xbf16>, vector<32x128xf32> -> vector<32x128xf32>
    %56 = vector.broadcast %1 : vector<1x128xf32> to vector<32x128xf32>
    %57 = arith.addf %55, %56 : vector<32x128xf32>
    %cst_21 = arith.constant 0.000000e+00 : f32
    %58 = vector.broadcast %cst_21 : f32 to vector<32x128xf32>
    %59 = arith.maximumf %57, %58 : vector<32x128xf32>
    %60 = vector.shape_cast %59 : vector<32x128xf32> to vector<2x16x128xf32>
    %61 = vector.extract_strided_slice %60 {offsets = [0, 0, 0], sizes = [2, 8, 128], strides = [1, 1, 1]} : vector<2x16x128xf32> to vector<2x8x128xf32>
    %62 = vector.broadcast %3 : vector<1x1x128xf32> to vector<2x8x128xf32>
    %63 = arith.mulf %61, %62 : vector<2x8x128xf32>
    %cst_22 = arith.constant dense<0.000000e+00> : vector<2x8xf32>
    %64 = vector.multi_reduction <add>, %63, %cst_22 [2] : vector<2x8x128xf32> to vector<2x8xf32>
    %cst_23 = arith.constant 0.000000e+00 : f32
    %65 = vector.broadcast %cst_23 : f32 to vector<2x8xf32>
    %66 = arith.maximumf %64, %65 : vector<2x8xf32>
    %67 = vector.broadcast %6 : f32 to vector<2x8xf32>
    %68 = arith.mulf %66, %67 : vector<2x8xf32>
    %cst_24 = arith.constant dense<0xFF800000> : vector<2xf32>
    %69 = vector.multi_reduction <maximumf>, %68, %cst_24 [1] : vector<2x8xf32> to vector<2xf32>
    %70 = vector.shape_cast %69 : vector<2xf32> to vector<2x1xf32>
    %71 = vector.broadcast %70 : vector<2x1xf32> to vector<2x8xf32>
    %72 = arith.subf %68, %71 : vector<2x8xf32>
    %73 = math.exp %72 : vector<2x8xf32>
    %cst_25 = arith.constant dense<0.000000e+00> : vector<2xf32>
    %74 = vector.multi_reduction <add>, %73, %cst_25 [1] : vector<2x8xf32> to vector<2xf32>
    %75 = vector.shape_cast %74 : vector<2xf32> to vector<2x1xf32>
    %76 = vector.shape_cast %73 : vector<2x8xf32> to vector<2x8x1xf32>
    %77 = vector.broadcast %76 : vector<2x8x1xf32> to vector<2x8x128xf32>
    %78 = arith.mulf %77, %61 : vector<2x8x128xf32>
    %cst_26 = arith.constant dense<0.000000e+00> : vector<2x128xf32>
    %79 = vector.multi_reduction <add>, %78, %cst_26 [1] : vector<2x8x128xf32> to vector<2x128xf32>
    %80 = tpu.reciprocal %75 {approx = true} : vector<2x1xf32> -> vector<2x1xf32>
    %81 = vector.broadcast %80 : vector<2x1xf32> to vector<2x128xf32>
    %82 = arith.mulf %79, %81 : vector<2x128xf32>
    %83 = vector.extract_strided_slice %60 {offsets = [0, 8, 0], sizes = [2, 8, 128], strides = [1, 1, 1]} : vector<2x16x128xf32> to vector<2x8x128xf32>
    %84 = vector.broadcast %5 : vector<1x1x128xf32> to vector<2x8x128xf32>
    %85 = arith.mulf %83, %84 : vector<2x8x128xf32>
    %cst_27 = arith.constant dense<0.000000e+00> : vector<2x8xf32>
    %86 = vector.multi_reduction <add>, %85, %cst_27 [2] : vector<2x8x128xf32> to vector<2x8xf32>
    %cst_28 = arith.constant 0.000000e+00 : f32
    %87 = vector.broadcast %cst_28 : f32 to vector<2x8xf32>
    %88 = arith.maximumf %86, %87 : vector<2x8xf32>
    %89 = vector.broadcast %7 : f32 to vector<2x8xf32>
    %90 = arith.mulf %88, %89 : vector<2x8xf32>
    %cst_29 = arith.constant dense<0xFF800000> : vector<2xf32>
    %91 = vector.multi_reduction <maximumf>, %90, %cst_29 [1] : vector<2x8xf32> to vector<2xf32>
    %92 = vector.shape_cast %91 : vector<2xf32> to vector<2x1xf32>
    %93 = vector.broadcast %92 : vector<2x1xf32> to vector<2x8xf32>
    %94 = arith.subf %90, %93 : vector<2x8xf32>
    %95 = math.exp %94 : vector<2x8xf32>
    %cst_30 = arith.constant dense<0.000000e+00> : vector<2xf32>
    %96 = vector.multi_reduction <add>, %95, %cst_30 [1] : vector<2x8xf32> to vector<2xf32>
    %97 = vector.shape_cast %96 : vector<2xf32> to vector<2x1xf32>
    %98 = vector.shape_cast %95 : vector<2x8xf32> to vector<2x8x1xf32>
    %99 = vector.broadcast %98 : vector<2x8x1xf32> to vector<2x8x128xf32>
    %100 = arith.mulf %99, %83 : vector<2x8x128xf32>
    %cst_31 = arith.constant dense<0.000000e+00> : vector<2x128xf32>
    %101 = vector.multi_reduction <add>, %100, %cst_31 [1] : vector<2x8x128xf32> to vector<2x128xf32>
    %102 = tpu.reciprocal %97 {approx = true} : vector<2x1xf32> -> vector<2x1xf32>
    %103 = vector.broadcast %102 : vector<2x1xf32> to vector<2x128xf32>
    %104 = arith.mulf %101, %103 : vector<2x128xf32>
    %105 = arith.truncf %60 : vector<2x16x128xf32> to vector<2x16x128xbf16>
    %106 = vector.shape_cast %105 : vector<2x16x128xbf16> to vector<32x128xbf16>
    %cst_32 = arith.constant dense<0.000000e+00> : vector<32x128xf32>
    %107 = tpu.matmul %106, %0, %cst_32 {dimension_numbers = #tpu.dot_dimension_numbers<[1], [0], [0], [1], [0, 0, 1, 1], [], []>} : vector<32x128xbf16>, vector<128x128xbf16>, vector<32x128xf32> -> vector<32x128xf32>
    %108 = vector.broadcast %1 : vector<1x128xf32> to vector<32x128xf32>
    %109 = arith.addf %107, %108 : vector<32x128xf32>
    %cst_33 = arith.constant 0.000000e+00 : f32
    %110 = vector.broadcast %cst_33 : f32 to vector<32x128xf32>
    %111 = arith.maximumf %109, %110 : vector<32x128xf32>
    %112 = vector.shape_cast %111 : vector<32x128xf32> to vector<2x16x128xf32>
    %113 = vector.extract_strided_slice %112 {offsets = [0, 0, 0], sizes = [2, 8, 128], strides = [1, 1, 1]} : vector<2x16x128xf32> to vector<2x8x128xf32>
    %114 = vector.broadcast %3 : vector<1x1x128xf32> to vector<2x8x128xf32>
    %115 = arith.mulf %113, %114 : vector<2x8x128xf32>
    %cst_34 = arith.constant dense<0.000000e+00> : vector<2x8xf32>
    %116 = vector.multi_reduction <add>, %115, %cst_34 [2] : vector<2x8x128xf32> to vector<2x8xf32>
    %cst_35 = arith.constant 0.000000e+00 : f32
    %117 = vector.broadcast %cst_35 : f32 to vector<2x8xf32>
    %118 = arith.maximumf %116, %117 : vector<2x8xf32>
    %119 = vector.broadcast %6 : f32 to vector<2x8xf32>
    %120 = arith.mulf %118, %119 : vector<2x8xf32>
    %cst_36 = arith.constant dense<0xFF800000> : vector<2xf32>
    %121 = vector.multi_reduction <maximumf>, %120, %cst_36 [1] : vector<2x8xf32> to vector<2xf32>
    %122 = vector.shape_cast %121 : vector<2xf32> to vector<2x1xf32>
    %123 = vector.broadcast %122 : vector<2x1xf32> to vector<2x8xf32>
    %124 = arith.subf %120, %123 : vector<2x8xf32>
    %125 = math.exp %124 : vector<2x8xf32>
    %cst_37 = arith.constant dense<0.000000e+00> : vector<2xf32>
    %126 = vector.multi_reduction <add>, %125, %cst_37 [1] : vector<2x8xf32> to vector<2xf32>
    %127 = vector.shape_cast %126 : vector<2xf32> to vector<2x1xf32>
    %128 = vector.shape_cast %125 : vector<2x8xf32> to vector<2x8x1xf32>
    %129 = vector.broadcast %128 : vector<2x8x1xf32> to vector<2x8x128xf32>
    %130 = arith.mulf %129, %113 : vector<2x8x128xf32>
    %cst_38 = arith.constant dense<0.000000e+00> : vector<2x128xf32>
    %131 = vector.multi_reduction <add>, %130, %cst_38 [1] : vector<2x8x128xf32> to vector<2x128xf32>
    %132 = tpu.reciprocal %127 {approx = true} : vector<2x1xf32> -> vector<2x1xf32>
    %133 = vector.broadcast %132 : vector<2x1xf32> to vector<2x128xf32>
    %134 = arith.mulf %131, %133 : vector<2x128xf32>
    %135 = vector.extract_strided_slice %112 {offsets = [0, 8, 0], sizes = [2, 8, 128], strides = [1, 1, 1]} : vector<2x16x128xf32> to vector<2x8x128xf32>
    %136 = vector.broadcast %5 : vector<1x1x128xf32> to vector<2x8x128xf32>
    %137 = arith.mulf %135, %136 : vector<2x8x128xf32>
    %cst_39 = arith.constant dense<0.000000e+00> : vector<2x8xf32>
    %138 = vector.multi_reduction <add>, %137, %cst_39 [2] : vector<2x8x128xf32> to vector<2x8xf32>
    %cst_40 = arith.constant 0.000000e+00 : f32
    %139 = vector.broadcast %cst_40 : f32 to vector<2x8xf32>
    %140 = arith.maximumf %138, %139 : vector<2x8xf32>
    %141 = vector.broadcast %7 : f32 to vector<2x8xf32>
    %142 = arith.mulf %140, %141 : vector<2x8xf32>
    %cst_41 = arith.constant dense<0xFF800000> : vector<2xf32>
    %143 = vector.multi_reduction <maximumf>, %142, %cst_41 [1] : vector<2x8xf32> to vector<2xf32>
    %144 = vector.shape_cast %143 : vector<2xf32> to vector<2x1xf32>
    %145 = vector.broadcast %144 : vector<2x1xf32> to vector<2x8xf32>
    %146 = arith.subf %142, %145 : vector<2x8xf32>
    %147 = math.exp %146 : vector<2x8xf32>
    %cst_42 = arith.constant dense<0.000000e+00> : vector<2xf32>
    %148 = vector.multi_reduction <add>, %147, %cst_42 [1] : vector<2x8xf32> to vector<2xf32>
    %149 = vector.shape_cast %148 : vector<2xf32> to vector<2x1xf32>
    %150 = vector.shape_cast %147 : vector<2x8xf32> to vector<2x8x1xf32>
    %151 = vector.broadcast %150 : vector<2x8x1xf32> to vector<2x8x128xf32>
    %152 = arith.mulf %151, %135 : vector<2x8x128xf32>
    %cst_43 = arith.constant dense<0.000000e+00> : vector<2x128xf32>
    %153 = vector.multi_reduction <add>, %152, %cst_43 [1] : vector<2x8x128xf32> to vector<2x128xf32>
    %154 = tpu.reciprocal %149 {approx = true} : vector<2x1xf32> -> vector<2x1xf32>
    %155 = vector.broadcast %154 : vector<2x1xf32> to vector<2x128xf32>
    %156 = arith.mulf %153, %155 : vector<2x128xf32>
    %157 = arith.truncf %31 : vector<2x128xf32> to vector<2x128xbf16>
    %158 = arith.truncf %82 : vector<2x128xf32> to vector<2x128xbf16>
    %159 = arith.truncf %134 : vector<2x128xf32> to vector<2x128xbf16>
    %160 = arith.truncf %53 : vector<2x128xf32> to vector<2x128xbf16>
    %161 = arith.truncf %104 : vector<2x128xf32> to vector<2x128xbf16>
    %162 = arith.truncf %156 : vector<2x128xf32> to vector<2x128xbf16>
    %163 = tpu.concatenate %157, %158, %159, %160, %161, %162 in 1 : vector<2x128xbf16>, vector<2x128xbf16>, vector<2x128xbf16>, vector<2x128xbf16>, vector<2x128xbf16>, vector<2x128xbf16> -> vector<2x768xbf16>
    %c0_44 = arith.constant 0 : index
    %c0_45 = arith.constant 0 : index
    %164 = vector.load %arg7[%c0_44, %c0_45] : memref<768x128xbf16, #tpu.memory_space<vmem>>, vector<768x128xbf16>
    %cst_46 = arith.constant dense<0.000000e+00> : vector<2x128xf32>
    %165 = tpu.matmul %163, %164, %cst_46 {dimension_numbers = #tpu.dot_dimension_numbers<[1], [0], [0], [1], [0, 0, 1, 1], [], []>} : vector<2x768xbf16>, vector<768x128xbf16>, vector<2x128xf32> -> vector<2x128xf32>
    %c0_47 = arith.constant 0 : index
    %c0_48 = arith.constant 0 : index
    %166 = vector.load %arg8[%c0_47, %c0_48] : memref<1x128xf32, #tpu.memory_space<vmem>>, vector<1x128xf32>
    %167 = vector.broadcast %166 : vector<1x128xf32> to vector<2x128xf32>
    %168 = arith.addf %165, %167 : vector<2x128xf32>
    %c0_49 = arith.constant 0 : index
    %c0_50 = arith.constant 0 : index
    %169 = vector.load %arg9[%c0_49, %c0_50] : memref<2x128xf32, #tpu.memory_space<vmem>>, vector<2x128xf32>
    tpu.vector_store %arg9[%c0_49, %c0_50], %168 {strides = array<i32>} : memref<2x128xf32, #tpu.memory_space<vmem>>, vector<2x128xf32>,
    return
  }
  func.func @transform_0(%arg0: i32) -> (i32, i32, i32) {
    %c0_i32 = arith.constant 0 : i32
    %c0_i32_0 = arith.constant 0 : i32
    %c0_i32_1 = arith.constant 0 : i32
    return %arg0, %c0_i32, %c0_i32_0 : i32, i32, i32
  }
  func.func @transform_1(%arg0: i32) -> i32 {
    %c0_i32 = arith.constant 0 : i32
    %c0_i32_0 = arith.constant 0 : i32
    return %c0_i32 : i32
  }
  func.func @transform_2(%arg0: i32) -> (i32, i32) {
    %c0_i32 = arith.constant 0 : i32
    %c0_i32_0 = arith.constant 0 : i32
    %c0_i32_1 = arith.constant 0 : i32
    return %c0_i32, %c0_i32_0 : i32, i32
  }
  func.func @transform_3(%arg0: i32) -> (i32, i32) {
    %c0_i32 = arith.constant 0 : i32
    %c0_i32_0 = arith.constant 0 : i32
    %c0_i32_1 = arith.constant 0 : i32
    return %c0_i32, %c0_i32_0 : i32, i32
  }
  func.func @transform_4(%arg0: i32) -> (i32, i32) {
    %c0_i32 = arith.constant 0 : i32
    %c0_i32_0 = arith.constant 0 : i32
    %c0_i32_1 = arith.constant 0 : i32
    return %c0_i32, %c0_i32_0 : i32, i32
  }
  func.func @transform_5(%arg0: i32) -> (i32, i32) {
    %c0_i32 = arith.constant 0 : i32
    %c0_i32_0 = arith.constant 0 : i32
    %c0_i32_1 = arith.constant 0 : i32
    return %c0_i32, %c0_i32_0 : i32, i32
  }
  func.func @transform_6(%arg0: i32) -> (i32, i32) {
    %c0_i32 = arith.constant 0 : i32
    %c0_i32_0 = arith.constant 0 : i32
    %c0_i32_1 = arith.constant 0 : i32
    return %c0_i32, %c0_i32_0 : i32, i32
  }
  func.func @transform_7(%arg0: i32) -> (i32, i32) {
    %c0_i32 = arith.constant 0 : i32
    %c0_i32_0 = arith.constant 0 : i32
    %c0_i32_1 = arith.constant 0 : i32
    return %c0_i32, %c0_i32_0 : i32, i32
  }
  func.func @transform_8(%arg0: i32) -> (i32, i32) {
    %c0_i32 = arith.constant 0 : i32
    %c0_i32_0 = arith.constant 0 : i32
    return %arg0, %c0_i32 : i32, i32
  }
}

</mosaic_0001>

<llo_original>
// kernel: tpu_custom_call.1
$region0: #{tpu_custom_call.1}
  #allocation0 [shape = 'u32[]', space=smem, size = 0x4, offset = 0x4, fixed_abs, tag = 'smem constant byte address 0x4 - core index']
  #allocation1 [shape = 'u32[144,128]{1,0:T(1,128)}', space=vmem, size = 0x12000, scoped, tag = 'internal scratch']
  %s0 = inlined_call_operand.hbm [shape: bf16[2,16,128], index: 0, kind: input, shape index: {}]
  %s1 = inlined_call_operand.vmem [shape: f32[2], index: 1, kind: input, shape index: {}]
  %s2 = inlined_call_operand.vmem [shape: f32[1,128], index: 2, kind: input, shape index: {}]
  %s3 = inlined_call_operand.vmem [shape: f32[1,128], index: 3, kind: input, shape index: {}]
  %s4 = inlined_call_operand.hbm [shape: bf16[128,128], index: 4, kind: input, shape index: {}]
  %s5 = inlined_call_operand.vmem [shape: f32[1,128], index: 5, kind: input, shape index: {}]
  %s6 = inlined_call_operand.hbm [shape: bf16[768,128], index: 6, kind: input, shape index: {}]
  %s7 = inlined_call_operand.vmem [shape: f32[1,128], index: 7, kind: input, shape index: {}]
  %s8 = inlined_call_operand.hbm [shape: f32[2,128], index: 8, kind: output, shape index: {}]
  %s9 = sld [smem:[#allocation0]]
  $region58: #{tpu_custom_call.1} parent=0
    _
  %s11 = ssub.s32 1, %s9
  %s12 = scalar_select 0, %s11, %s9
  $region1: #{tpu_custom_call.1} parent=0
    #allocation2 [shape = 'u8[8192]{0}', space=vmem, size = 0x2000, scoped, tag = 'input window, operand 0, single buffered']
    #allocation3 [shape = 's32[1]{0}', space=sflag, size = 0x4, scoped, tag = 'scoped memory for tpu_custom_call.1']
    #allocation4 [shape = 's32[1]{0}', space=sflag, size = 0x4, scoped, tag = 'scoped memory for tpu_custom_call.1']
    #allocation5 [shape = 's32[1]{0}', space=sflag, size = 0x4, scoped, tag = 'scoped memory for tpu_custom_call.1']
    #allocation6 [shape = 'u8[512]{0}', space=smem, size = 0x200, scoped, tag = 'input window, operand 1, single buffered']
    #allocation7 [shape = 'u8[32768]{0}', space=vmem, size = 0x8000, scoped, tag = 'input window, operand 4, single buffered']
    #allocation8 [shape = 's32[1]{0}', space=sflag, size = 0x4, scoped, tag = 'scoped memory for tpu_custom_call.1']
    #allocation9 [shape = 'u8[196608]{0}', space=vmem, size = 0x30000, scoped, tag = 'input window, operand 6, single buffered']
    #allocation10 [shape = 'u8[1024]{0}', space=vmem, size = 0x400, scoped, tag = 'output window, operand 0, single buffered']
    %13 = vsyncpa [#allocation3], 0
    %14 = vsyncpa [#allocation5], 0
    %15 = vsyncpa [#allocation8], 0
    %16 = vsyncpa [#allocation4], 0
    // Predicated region
    $region2: #{tpu_custom_call.1} parent=1 // pred_check
      _
    $region3: #{tpu_custom_call.1} parent=1 // pred_check_branch
      %18 = sbr.rel (0) target = $region5
    $region4: #{tpu_custom_call.1} parent=1 // pred_region
      %s20 = ssub.s32 256, 256
      %21 = vsyncadd [#allocation3], %s20
      %s22 = sshll.u32 [#allocation2], 4
      %s23 = int_to_ptr.vmem [resolvable:$true] %s22
      %28 = dma.hbm_to_vmem [thread:$0]  %s0, 256, %s23, [#allocation3], 64, 64, 4
    $region5: #{tpu_custom_call.1} parent=1 // pred_fallthru
      _
    // Predicated region
    $region6: #{tpu_custom_call.1} parent=1 // pred_check
      _
    $region7: #{tpu_custom_call.1} parent=1 // pred_check_branch
      %30 = sbr.rel (0) target = $region9
    $region8: #{tpu_custom_call.1} parent=1 // pred_region
      %s32 = ssub.s32 16, 16
      %33 = vsyncadd [#allocation5], %s32
      %s35 = sshll.u32 %s1, 4
      %s36 = int_to_ptr.vmem [resolvable:$true] %s35
      %38 = dma.vmem_to_smem %s36, 16, [#allocation6], [#allocation5]
    $region9: #{tpu_custom_call.1} parent=1 // pred_fallthru
      _
    // Predicated region
    $region10: #{tpu_custom_call.1} parent=1 // pred_check
      _
    $region11: #{tpu_custom_call.1} parent=1 // pred_check_branch
      %40 = sbr.rel (0) target = $region13
    $region12: #{tpu_custom_call.1} parent=1 // pred_region
      _
    $region13: #{tpu_custom_call.1} parent=1 // pred_fallthru
      _
    // Predicated region
    $region14: #{tpu_custom_call.1} parent=1 // pred_check
      _
    $region15: #{tpu_custom_call.1} parent=1 // pred_check_branch
      %42 = sbr.rel (0) target = $region17
    $region16: #{tpu_custom_call.1} parent=1 // pred_region
      _
    $region17: #{tpu_custom_call.1} parent=1 // pred_fallthru
      _
    // Predicated region
    $region18: #{tpu_custom_call.1} parent=1 // pred_check
      _
    $region19: #{tpu_custom_call.1} parent=1 // pred_check_branch
      %44 = sbr.rel (0) target = $region21
    $region20: #{tpu_custom_call.1} parent=1 // pred_region
      %s46 = ssub.s32 1024, 1024
      %47 = vsyncadd [#allocation8], %s46
      %s48 = sshll.u32 [#allocation7], 4
      %s49 = int_to_ptr.vmem [resolvable:$true] %s48
      %54 = dma.hbm_to_vmem [thread:$0]  %s4, 1024, %s49, [#allocation8], 64, 64, 4
    $region21: #{tpu_custom_call.1} parent=1 // pred_fallthru
      _
    // Predicated region
    $region22: #{tpu_custom_call.1} parent=1 // pred_check
      _
    $region23: #{tpu_custom_call.1} parent=1 // pred_check_branch
      %56 = sbr.rel (0) target = $region25
    $region24: #{tpu_custom_call.1} parent=1 // pred_region
      _
    $region25: #{tpu_custom_call.1} parent=1 // pred_fallthru
      _
    // Predicated region
    $region26: #{tpu_custom_call.1} parent=1 // pred_check
      _
    $region27: #{tpu_custom_call.1} parent=1 // pred_check_branch
      %58 = sbr.rel (0) target = $region29
    $region28: #{tpu_custom_call.1} parent=1 // pred_region
      %s60 = ssub.s32 6144, 6144
      %61 = vsyncadd [#allocation8], %s60
      %s62 = sshll.u32 [#allocation9], 4
      %s63 = int_to_ptr.vmem [resolvable:$true] %s62
      %68 = dma.hbm_to_vmem [thread:$0]  %s6, 6144, %s63, [#allocation8], 64, 64, 4
    $region29: #{tpu_custom_call.1} parent=1 // pred_fallthru
      _
    // Predicated region
    $region30: #{tpu_custom_call.1} parent=1 // pred_check
      _
    $region31: #{tpu_custom_call.1} parent=1 // pred_check_branch
      %70 = sbr.rel (0) target = $region33
    $region32: #{tpu_custom_call.1} parent=1 // pred_region
      _
    $region33: #{tpu_custom_call.1} parent=1 // pred_fallthru
      _
    // Predicated region
    $region34: #{tpu_custom_call.1} parent=1 // pred_check
      _
    $region35: #{tpu_custom_call.1} parent=1 // pred_check_branch
      %72 = sbr.rel (0) target = $region37
    $region36: #{tpu_custom_call.1} parent=1 // pred_region
      %73 = dma.done [#allocation3], 256
    $region37: #{tpu_custom_call.1} parent=1 // pred_fallthru
      _
    // Predicated region
    $region38: #{tpu_custom_call.1} parent=1 // pred_check
      _
    $region39: #{tpu_custom_call.1} parent=1 // pred_check_branch
      %75 = sbr.rel (0) target = $region41
    $region40: #{tpu_custom_call.1} parent=1 // pred_region
      %76 = dma.done [#allocation5], 16
    $region41: #{tpu_custom_call.1} parent=1 // pred_fallthru
      _
    // Predicated region
    $region42: #{tpu_custom_call.1} parent=1 // pred_check
      _
    $region43: #{tpu_custom_call.1} parent=1 // pred_check_branch
      %78 = sbr.rel (0) target = $region45
    $region44: #{tpu_custom_call.1} parent=1 // pred_region
      %79 = dma.done [#allocation8], 1024
    $region45: #{tpu_custom_call.1} parent=1 // pred_fallthru
      _
    // Predicated region
    $region46: #{tpu_custom_call.1} parent=1 // pred_check
      _
    $region47: #{tpu_custom_call.1} parent=1 // pred_check_branch
      %81 = sbr.rel (0) target = $region49
    $region48: #{tpu_custom_call.1} parent=1 // pred_region
      %82 = dma.done [#allocation8], 6144
    $region49: #{tpu_custom_call.1} parent=1 // pred_fallthru
      _
    %83 = sfence
    %v85 = vld [vmem:[#allocation7] sm:$0xf]
    %v86 = vld [vmem:[#allocation7 + $0x4] sm:$0xf]
    %v87 = vld [vmem:[#allocation7 + $0x8] sm:$0xf]
    %v88 = vld [vmem:[#allocation7 + $0xc] sm:$0xf]
    %v89 = vld [vmem:[#allocation7 + $0x10] sm:$0xf]
    %v90 = vld [vmem:[#allocation7 + $0x14] sm:$0xf]
    %v91 = vld [vmem:[#allocation7 + $0x18] sm:$0xf]
    %v92 = vld [vmem:[#allocation7 + $0x1c] sm:$0xf]
    %v93 = vld [vmem:[#allocation7 + $0x20] sm:$0xf]
    %v94 = vld [vmem:[#allocation7 + $0x24] sm:$0xf]
    %v95 = vld [vmem:[#allocation7 + $0x28] sm:$0xf]
    %v96 = vld [vmem:[#allocation7 + $0x2c] sm:$0xf]
    %v97 = vld [vmem:[#allocation7 + $0x30] sm:$0xf]
    %v98 = vld [vmem:[#allocation7 + $0x34] sm:$0xf]
    %v99 = vld [vmem:[#allocation7 + $0x38] sm:$0xf]
    %v100 = vld [vmem:[#allocation7 + $0x3c] sm:$0xf]
    %v101 = vld [vmem:[%s5] sm:$0x1]
    %v102 = vld [vmem:[%s2] sm:$0x1]
    %v103 = vld [vmem:[%s3] sm:$0x1]
    %s104 = sld [smem:[#allocation6]]
    %s105 = sld [smem:[#allocation6 + $0x1]]
    %v106 = vld [vmem:[#allocation2] sm:$0xf]
    %v107 = vld [vmem:[#allocation2 + $0x4] sm:$0xf]
    %v108 = vld [vmem:[#allocation2 + $0x8] sm:$0xf]
    %v109 = vld [vmem:[#allocation2 + $0xc] sm:$0xf]
    %v110 = vunpack.c.l.bf16 %v106
    %v111 = vunpack.c.l.bf16 %v107
    %v112 = vunpack.c.l.bf16 %v108
    %v113 = vunpack.c.l.bf16 %v109
    %v115 = vlaneseq
    %v116 = vshrl.u32 %v115, 7
    %v117 = vsub.s32 0, %v116
    %v118 = vrot.slane %v102, %v117
    %v120 = vmul.f32 %v110, %v118
    %v121 = vmul.f32 %v112, %v118
    %122 = vadd.xlane.f32.xlu0 %v120
    %v123 = vpop.xlane.xlu0 %122
    %124 = vadd.xlane.f32.xlu0 %v121
    %v125 = vpop.xlane.xlu0 %124
    %v126 = vmax.f32 %v123, 0.0
    %v127 = vmax.f32 %v125, 0.0
    %v128 = vstv %s104
    %v129 = vmul.f32 %v126, %v128
    %v130 = vmul.f32 %v127, %v128
    %v133 = vlaneseq
    %v134 = vand.u32 %v133, 127
    %v135 = vlaneseq
    %v136 = vshrl.u32 %v135, 7
    %v137 = vsub.s32 %v134, %v136
    %v138 = vrot.slane %v129, %v137
    %v139 = vlaneseq
    %v140 = vshrl.u32 %v139, 7
    %v141 = vsub.s32 %v134, %v140
    %v142 = vrot.slane %v130, %v141
    %vm143 = vcmask 1041409
    %v144 = vsel %vm143, %v142, %v138
    %vm146 = vcmask 58368
    %v147 = vsel %vm146, %v144, -inf
    %148 = vmax.xlane.f32.xlu0 %v147
    %v149 = vpop.xlane.xlu0 %148
    %v151 = vlaneseq
    %v152 = vshrl.u32 %v151, 7
    %v153 = vsub.s32 0, %v152
    %v154 = vrot.slane %v149, %v153
    %v155 = vlaneseq
    %v156 = vshrl.u32 %v155, 7
    %v157 = vsub.s32 1, %v156
    %v158 = vrot.slane %v149, %v157
    %v161 = vsub.f32 %v129, %v154
    %v162 = vsub.f32 %v130, %v158
    %v163 = vmul.f32 %v161, 1.442695
    %v164 = vpow.pop %v163
    %v165 = vmul.f32 %v162, 1.442695
    %v166 = vpow.pop %v165
    %169 = vset.pattern.permute.xlu0 0
    %170 = vperm.xlu0 %169, %v164
    %v171 = vpop.permute.xlu0 %170
    %172 = vset.pattern.permute.xlu0 0
    %173 = vperm.xlu0 %172, %v166
    %v174 = vpop.permute.xlu0 %173
    %v175 = vlaneseq
    %v176 = vshrl.u32 %v175, 7
    %v177 = vsub.s32 %v134, %v176
    %v178 = vrot.slane %v171, %v177
    %v179 = vlaneseq
    %v180 = vshrl.u32 %v179, 7
    %v181 = vsub.s32 %v134, %v180
    %v182 = vrot.slane %v174, %v181
    %v183 = vsel %vm143, %v182, %v178
    %v185 = vsel %vm146, %v183, 0.0
    %186 = vadd.xlane.f32.xlu0 %v185
    %v187 = vpop.xlane.xlu0 %186
    %v190 = vmul.f32 %v171, %v110
    %v191 = vmul.f32 %v174, %v112
    %v192 = vrot.slane %v190, 4
    %v193 = vadd.f32 %v190, %v192
    %v194 = vrot.slane %v193, 2
    %v195 = vadd.f32 %v193, %v194
    %v196 = vrot.slane %v195, 1
    %v197 = vadd.f32 %v195, %v196
    %v198 = vrot.slane %v191, 4
    %v199 = vadd.f32 %v191, %v198
    %v200 = vrot.slane %v199, 2
    %v201 = vadd.f32 %v199, %v200
    %v202 = vrot.slane %v201, 1
    %v203 = vadd.f32 %v201, %v202
    %v204 = vrcp.pop %v187
    %v206 = vrot.slane %v204, 1
    %v209 = vmul.f32 %v197, %v204
    %v210 = vmul.f32 %v203, %v206
    %v212 = vlaneseq
    %v213 = vshrl.u32 %v212, 7
    %v214 = vsub.s32 0, %v213
    %v215 = vrot.slane %v103, %v214
    %v217 = vmul.f32 %v111, %v215
    %v218 = vmul.f32 %v113, %v215
    %219 = vadd.xlane.f32.xlu0 %v217
    %v220 = vpop.xlane.xlu0 %219
    %221 = vadd.xlane.f32.xlu0 %v218
    %v222 = vpop.xlane.xlu0 %221
    %v223 = vmax.f32 %v220, 0.0
    %v224 = vmax.f32 %v222, 0.0
    %v225 = vstv %s105
    %v226 = vmul.f32 %v223, %v225
    %v227 = vmul.f32 %v224, %v225
    %v230 = vlaneseq
    %v231 = vshrl.u32 %v230, 7
    %v232 = vsub.s32 %v134, %v231
    %v233 = vrot.slane %v226, %v232
    %v234 = vlaneseq
    %v235 = vshrl.u32 %v234, 7
    %v236 = vsub.s32 %v134, %v235
    %v237 = vrot.slane %v227, %v236
    %v238 = vsel %vm143, %v237, %v233
    %v240 = vsel %vm146, %v238, -inf
    %241 = vmax.xlane.f32.xlu0 %v240
    %v242 = vpop.xlane.xlu0 %241
    %v244 = vlaneseq
    %v245 = vshrl.u32 %v244, 7
    %v246 = vsub.s32 0, %v245
    %v247 = vrot.slane %v242, %v246
    %v248 = vlaneseq
    %v249 = vshrl.u32 %v248, 7
    %v250 = vsub.s32 1, %v249
    %v251 = vrot.slane %v242, %v250
    %v254 = vsub.f32 %v226, %v247
    %v255 = vsub.f32 %v227, %v251
    %v256 = vmul.f32 %v254, 1.442695
    %v257 = vpow.pop %v256
    %v258 = vmul.f32 %v255, 1.442695
    %v259 = vpow.pop %v258
    %262 = vset.pattern.permute.xlu0 0
    %263 = vperm.xlu0 %262, %v257
    %v264 = vpop.permute.xlu0 %263
    %265 = vset.pattern.permute.xlu0 0
    %266 = vperm.xlu0 %265, %v259
    %v267 = vpop.permute.xlu0 %266
    %v268 = vlaneseq
    %v269 = vshrl.u32 %v268, 7
    %v270 = vsub.s32 %v134, %v269
    %v271 = vrot.slane %v264, %v270
    %v272 = vlaneseq
    %v273 = vshrl.u32 %v272, 7
    %v274 = vsub.s32 %v134, %v273
    %v275 = vrot.slane %v267, %v274
    %v276 = vsel %vm143, %v275, %v271
    %v278 = vsel %vm146, %v276, 0.0
    %279 = vadd.xlane.f32.xlu0 %v278
    %v280 = vpop.xlane.xlu0 %279
    %v283 = vmul.f32 %v264, %v111
    %v284 = vmul.f32 %v267, %v113
    %v285 = vrot.slane %v283, 4
    %v286 = vadd.f32 %v283, %v285
    %v287 = vrot.slane %v286, 2
    %v288 = vadd.f32 %v286, %v287
    %v289 = vrot.slane %v288, 1
    %v290 = vadd.f32 %v288, %v289
    %v291 = vrot.slane %v284, 4
    %v292 = vadd.f32 %v284, %v291
    %v293 = vrot.slane %v292, 2
    %v294 = vadd.f32 %v292, %v293
    %v295 = vrot.slane %v294, 1
    %v296 = vadd.f32 %v294, %v295
    %v297 = vrcp.pop %v280
    %v299 = vrot.slane %v297, 1
    %v302 = vmul.f32 %v290, %v297
    %v303 = vmul.f32 %v296, %v299
    %v305 = vlaneseq
    %v306 = vshrl.u32 %v305, 7
    %v307 = vsub.s32 0, %v306
    %v308 = vrot.slane %v101, %v307
    %v314 = vunpack.c.l.b16 %v106
    %v315 = vunpack.c.l.b16 %v107
    %v316 = vunpack.c.l.b16 %v108
    %v317 = vunpack.c.l.b16 %v109
    %v318 = vpack.c.b16 %v315, %v314
    %v319 = vpack.c.b16 %v317, %v316
    %v338 = vunpack.c.l.b16 %v85
    %v339 = vunpack.c.l.b16 %v86
    %v340 = vunpack.c.l.b16 %v87
    %v341 = vunpack.c.l.b16 %v88
    %v342 = vunpack.c.l.b16 %v89
    %v343 = vunpack.c.l.b16 %v90
    %v344 = vunpack.c.l.b16 %v91
    %v345 = vunpack.c.l.b16 %v92
    %v346 = vunpack.c.l.b16 %v93
    %v347 = vunpack.c.l.b16 %v94
    %v348 = vunpack.c.l.b16 %v95
    %v349 = vunpack.c.l.b16 %v96
    %v350 = vunpack.c.l.b16 %v97
    %v351 = vunpack.c.l.b16 %v98
    %v352 = vunpack.c.l.b16 %v99
    %v353 = vunpack.c.l.b16 %v100
    %v354 = vpack.c.b16 %v339, %v338
    %v355 = vpack.c.b16 %v341, %v340
    %v356 = vpack.c.b16 %v343, %v342
    %v357 = vpack.c.b16 %v345, %v344
    %v358 = vpack.c.b16 %v347, %v346
    %v359 = vpack.c.b16 %v349, %v348
    %v360 = vpack.c.b16 %v351, %v350
    %v361 = vpack.c.b16 %v353, %v352
    %370 = vmatprep.subr.bf16.mxu0 0
    %371 = vmatpush1.bf16.msra.mxu0 %v354
    %372 = vmatprep.subr.bf16.mxu0 0
    %373 = vmatpush1.bf16.msra.mxu0 %v355
    %374 = vmatprep.subr.bf16.mxu0 0
    %375 = vmatpush1.bf16.msra.mxu0 %v356
    %376 = vmatprep.subr.bf16.mxu0 0
    %377 = vmatpush1.bf16.msra.mxu0 %v357
    %378 = vmatprep.subr.bf16.mxu0 0
    %379 = vmatpush1.bf16.msra.mxu0 %v358
    %380 = vmatprep.subr.bf16.mxu0 0
    %381 = vmatpush1.bf16.msra.mxu0 %v359
    %382 = vmatprep.subr.bf16.mxu0 0
    %383 = vmatpush1.bf16.msra.mxu0 %v360
    %384 = vmatprep.subr.bf16.mxu0 0
    %385 = vmatpush1.bf16.msra.mxu0 %v361
    %386 = vmatprep.subr.bf16.mxu0 0
    %387 = vmatpush1.bf16.msra.mxu0 0
    %388 = vmatprep.subr.bf16.mxu0 0
    %389 = vmatpush1.bf16.msra.mxu0 0
    %390 = vmatprep.subr.bf16.mxu0 0
    %391 = vmatpush1.bf16.msra.mxu0 0
    %392 = vmatprep.subr.bf16.mxu0 0
    %393 = vmatpush1.bf16.msra.mxu0 0
    %394 = vmatprep.subr.bf16.mxu0 0
    %395 = vmatpush1.bf16.msra.mxu0 0
    %396 = vmatprep.subr.bf16.mxu0 0
    %397 = vmatpush1.bf16.msra.mxu0 0
    %398 = vmatprep.subr.bf16.mxu0 0
    %399 = vmatpush1.bf16.msra.mxu0 0
    %400 = vmatprep.subr.bf16.mxu0 0
    %401 = vmatpush1.bf16.msra.mxu0 0
    %402 = vmatprep.mubr.bf16.mxu0 0
    %403 = vmatmul.mubr.bf16.gmra.mrb[0].mxu0 %v318
    %v404 = vpop.f32.mrb[0].mxu0
    %v405 = vadd.f32 %v308, %v404
    %v406 = vpop.f32.mrb[0].mxu0
    %v407 = vpop.f32.mrb[0].mxu0
    %v408 = vadd.f32 %v308, %v407
    %v409 = vpop.f32.mrb[0].mxu0
    %410 = vmatprep.mubr.bf16.mxu0 0
    %411 = vmatmul.mubr.bf16.gmra.mrb[0].mxu0 %v319
    %v412 = vpop.f32.mrb[0].mxu0
    %v413 = vadd.f32 %v308, %v412
    %v414 = vpop.f32.mrb[0].mxu0
    %v415 = vpop.f32.mrb[0].mxu0
    %v416 = vadd.f32 %v308, %v415
    %v417 = vpop.f32.mrb[0].mxu0
    %418 = vdwg.mxu0
    %v419 = vmax.f32 %v405, 0.0
    %v420 = vmax.f32 %v408, 0.0
    %v421 = vmax.f32 %v413, 0.0
    %v422 = vmax.f32 %v416, 0.0
    %v423 = vmul.f32 %v419, %v118
    %v424 = vmul.f32 %v421, %v118
    %425 = vadd.xlane.f32.xlu0 %v423
    %v426 = vpop.xlane.xlu0 %425
    %427 = vadd.xlane.f32.xlu0 %v424
    %v428 = vpop.xlane.xlu0 %427
    %v429 = vmax.f32 %v426, 0.0
    %v430 = vmax.f32 %v428, 0.0
    %v431 = vmul.f32 %v429, %v128
    %v432 = vmul.f32 %v430, %v128
    %v435 = vlaneseq
    %v436 = vshrl.u32 %v435, 7
    %v437 = vsub.s32 %v134, %v436
    %v438 = vrot.slane %v431, %v437
    %v439 = vlaneseq
    %v440 = vshrl.u32 %v439, 7
    %v441 = vsub.s32 %v134, %v440
    %v442 = vrot.slane %v432, %v441
    %v443 = vsel %vm143, %v442, %v438
    %v445 = vsel %vm146, %v443, -inf
    %446 = vmax.xlane.f32.xlu0 %v445
    %v447 = vpop.xlane.xlu0 %446
    %v449 = vlaneseq
    %v450 = vshrl.u32 %v449, 7
    %v451 = vsub.s32 0, %v450
    %v452 = vrot.slane %v447, %v451
    %v453 = vlaneseq
    %v454 = vshrl.u32 %v453, 7
    %v455 = vsub.s32 1, %v454
    %v456 = vrot.slane %v447, %v455
    %v459 = vsub.f32 %v431, %v452
    %v460 = vsub.f32 %v432, %v456
    %v461 = vmul.f32 %v459, 1.442695
    %v462 = vpow.pop %v461
    %v463 = vmul.f32 %v460, 1.442695
    %v464 = vpow.pop %v463
    %467 = vset.pattern.permute.xlu0 0
    %468 = vperm.xlu0 %467, %v462
    %v469 = vpop.permute.xlu0 %468
    %470 = vset.pattern.permute.xlu0 0
    %471 = vperm.xlu0 %470, %v464
    %v472 = vpop.permute.xlu0 %471
    %v473 = vlaneseq
    %v474 = vshrl.u32 %v473, 7
    %v475 = vsub.s32 %v134, %v474
    %v476 = vrot.slane %v469, %v475
    %v477 = vlaneseq
    %v478 = vshrl.u32 %v477, 7
    %v479 = vsub.s32 %v134, %v478
    %v480 = vrot.slane %v472, %v479
    %v481 = vsel %vm143, %v480, %v476
    %v483 = vsel %vm146, %v481, 0.0
    %484 = vadd.xlane.f32.xlu0 %v483
    %v485 = vpop.xlane.xlu0 %484
    %v488 = vmul.f32 %v469, %v419
    %v489 = vmul.f32 %v472, %v421
    %v490 = vrot.slane %v488, 4
    %v491 = vadd.f32 %v488, %v490
    %v492 = vrot.slane %v491, 2
    %v493 = vadd.f32 %v491, %v492
    %v494 = vrot.slane %v493, 1
    %v495 = vadd.f32 %v493, %v494
    %v496 = vrot.slane %v489, 4
    %v497 = vadd.f32 %v489, %v496
    %v498 = vrot.slane %v497, 2
    %v499 = vadd.f32 %v497, %v498
    %v500 = vrot.slane %v499, 1
    %v501 = vadd.f32 %v499, %v500
    %v502 = vrcp.pop %v485
    %v504 = vrot.slane %v502, 1
    %v507 = vmul.f32 %v495, %v502
    %v508 = vmul.f32 %v501, %v504
    %v509 = vmul.f32 %v420, %v215
    %v510 = vmul.f32 %v422, %v215
    %511 = vadd.xlane.f32.xlu0 %v509
    %v512 = vpop.xlane.xlu0 %511
    %513 = vadd.xlane.f32.xlu0 %v510
    %v514 = vpop.xlane.xlu0 %513
    %v515 = vmax.f32 %v512, 0.0
    %v516 = vmax.f32 %v514, 0.0
    %v517 = vmul.f32 %v515, %v225
    %v518 = vmul.f32 %v516, %v225
    %v521 = vlaneseq
    %v522 = vshrl.u32 %v521, 7
    %v523 = vsub.s32 %v134, %v522
    %v524 = vrot.slane %v517, %v523
    %v525 = vlaneseq
    %v526 = vshrl.u32 %v525, 7
    %v527 = vsub.s32 %v134, %v526
    %v528 = vrot.slane %v518, %v527
    %v529 = vsel %vm143, %v528, %v524
    %v531 = vsel %vm146, %v529, -inf
    %532 = vmax.xlane.f32.xlu0 %v531
    %v533 = vpop.xlane.xlu0 %532
    %v535 = vlaneseq
    %v536 = vshrl.u32 %v535, 7
    %v537 = vsub.s32 0, %v536
    %v538 = vrot.slane %v533, %v537
    %v539 = vlaneseq
    %v540 = vshrl.u32 %v539, 7
    %v541 = vsub.s32 1, %v540
    %v542 = vrot.slane %v533, %v541
    %v545 = vsub.f32 %v517, %v538
    %v546 = vsub.f32 %v518, %v542
    %v547 = vmul.f32 %v545, 1.442695
    %v548 = vpow.pop %v547
    %v549 = vmul.f32 %v546, 1.442695
    %v550 = vpow.pop %v549
    %553 = vset.pattern.permute.xlu0 0
    %554 = vperm.xlu0 %553, %v548
    %v555 = vpop.permute.xlu0 %554
    %556 = vset.pattern.permute.xlu0 0
    %557 = vperm.xlu0 %556, %v550
    %v558 = vpop.permute.xlu0 %557
    %v559 = vlaneseq
    %v560 = vshrl.u32 %v559, 7
    %v561 = vsub.s32 %v134, %v560
    %v562 = vrot.slane %v555, %v561
    %v563 = vlaneseq
    %v564 = vshrl.u32 %v563, 7
    %v565 = vsub.s32 %v134, %v564
    %v566 = vrot.slane %v558, %v565
    %v567 = vsel %vm143, %v566, %v562
    %v569 = vsel %vm146, %v567, 0.0
    %570 = vadd.xlane.f32.xlu0 %v569
    %v571 = vpop.xlane.xlu0 %570
    %v574 = vmul.f32 %v555, %v420
    %v575 = vmul.f32 %v558, %v422
    %v576 = vrot.slane %v574, 4
    %v577 = vadd.f32 %v574, %v576
    %v578 = vrot.slane %v577, 2
    %v579 = vadd.f32 %v577, %v578
    %v580 = vrot.slane %v579, 1
    %v581 = vadd.f32 %v579, %v580
    %v582 = vrot.slane %v575, 4
    %v583 = vadd.f32 %v575, %v582
    %v584 = vrot.slane %v583, 2
    %v585 = vadd.f32 %v583, %v584
    %v586 = vrot.slane %v585, 1
    %v587 = vadd.f32 %v585, %v586
    %v588 = vrcp.pop %v571
    %v590 = vrot.slane %v588, 1
    %v593 = vmul.f32 %v581, %v588
    %v594 = vmul.f32 %v587, %v590
    %v595 = vpack.c.bf16 %v420, %v419
    %v596 = vpack.c.bf16 %v422, %v421
    %597 = vmatprep.subr.bf16.mxu0 0
    %598 = vmatpush1.bf16.msra.mxu0 %v354
    %599 = vmatprep.subr.bf16.mxu0 0
    %600 = vmatpush1.bf16.msra.mxu0 %v355
    %601 = vmatprep.subr.bf16.mxu0 0
    %602 = vmatpush1.bf16.msra.mxu0 %v356
    %603 = vmatprep.subr.bf16.mxu0 0
    %604 = vmatpush1.bf16.msra.mxu0 %v357
    %605 = vmatprep.subr.bf16.mxu0 0
    %606 = vmatpush1.bf16.msra.mxu0 %v358
    %607 = vmatprep.subr.bf16.mxu0 0
    %608 = vmatpush1.bf16.msra.mxu0 %v359
    %609 = vmatprep.subr.bf16.mxu0 0
    %610 = vmatpush1.bf16.msra.mxu0 %v360
    %611 = vmatprep.subr.bf16.mxu0 0
    %612 = vmatpush1.bf16.msra.mxu0 %v361
    %613 = vmatprep.subr.bf16.mxu0 0
    %614 = vmatpush1.bf16.msra.mxu0 0
    %615 = vmatprep.subr.bf16.mxu0 0
    %616 = vmatpush1.bf16.msra.mxu0 0
    %617 = vmatprep.subr.bf16.mxu0 0
    %618 = vmatpush1.bf16.msra.mxu0 0
    %619 = vmatprep.subr.bf16.mxu0 0
    %620 = vmatpush1.bf16.msra.mxu0 0
    %621 = vmatprep.subr.bf16.mxu0 0
    %622 = vmatpush1.bf16.msra.mxu0 0
    %623 = vmatprep.subr.bf16.mxu0 0
    %624 = vmatpush1.bf16.msra.mxu0 0
    %625 = vmatprep.subr.bf16.mxu0 0
    %626 = vmatpush1.bf16.msra.mxu0 0
    %627 = vmatprep.subr.bf16.mxu0 0
    %628 = vmatpush1.bf16.msra.mxu0 0
    %629 = vmatprep.mubr.bf16.mxu0 0
    %630 = vmatmul.mubr.bf16.gmra.mrb[0].mxu0 %v595
    %v631 = vpop.f32.mrb[0].mxu0
    %v632 = vadd.f32 %v308, %v631
    %v633 = vpop.f32.mrb[0].mxu0
    %v634 = vpop.f32.mrb[0].mxu0
    %v635 = vadd.f32 %v308, %v634
    %v636 = vpop.f32.mrb[0].mxu0
    %637 = vmatprep.mubr.bf16.mxu0 0
    %638 = vmatmul.mubr.bf16.gmra.mrb[0].mxu0 %v596
    %v639 = vpop.f32.mrb[0].mxu0
    %v640 = vadd.f32 %v308, %v639
    %v641 = vpop.f32.mrb[0].mxu0
    %v642 = vpop.f32.mrb[0].mxu0
    %v643 = vadd.f32 %v308, %v642
    %v644 = vpop.f32.mrb[0].mxu0
    %645 = vdwg.mxu0
    %v646 = vmax.f32 %v632, 0.0
    %v647 = vmax.f32 %v635, 0.0
    %v648 = vmax.f32 %v640, 0.0
    %v649 = vmax.f32 %v643, 0.0
    %v650 = vmul.f32 %v646, %v118
    %v651 = vmul.f32 %v648, %v118
    %652 = vadd.xlane.f32.xlu0 %v650
    %v653 = vpop.xlane.xlu0 %652
    %654 = vadd.xlane.f32.xlu0 %v651
    %v655 = vpop.xlane.xlu0 %654
    %v656 = vmax.f32 %v653, 0.0
    %v657 = vmax.f32 %v655, 0.0
    %v658 = vmul.f32 %v656, %v128
    %v659 = vmul.f32 %v657, %v128
    %v662 = vlaneseq
    %v663 = vshrl.u32 %v662, 7
    %v664 = vsub.s32 %v134, %v663
    %v665 = vrot.slane %v658, %v664
    %v666 = vlaneseq
    %v667 = vshrl.u32 %v666, 7
    %v668 = vsub.s32 %v134, %v667
    %v669 = vrot.slane %v659, %v668
    %v670 = vsel %vm143, %v669, %v665
    %v672 = vsel %vm146, %v670, -inf
    %673 = vmax.xlane.f32.xlu0 %v672
    %v674 = vpop.xlane.xlu0 %673
    %v676 = vlaneseq
    %v677 = vshrl.u32 %v676, 7
    %v678 = vsub.s32 0, %v677
    %v679 = vrot.slane %v674, %v678
    %v680 = vlaneseq
    %v681 = vshrl.u32 %v680, 7
    %v682 = vsub.s32 1, %v681
    %v683 = vrot.slane %v674, %v682
    %v686 = vsub.f32 %v658, %v679
    %v687 = vsub.f32 %v659, %v683
    %v688 = vmul.f32 %v686, 1.442695
    %v689 = vpow.pop %v688
    %v690 = vmul.f32 %v687, 1.442695
    %v691 = vpow.pop %v690
    %694 = vset.pattern.permute.xlu0 0
    %695 = vperm.xlu0 %694, %v689
    %v696 = vpop.permute.xlu0 %695
    %697 = vset.pattern.permute.xlu0 0
    %698 = vperm.xlu0 %697, %v691
    %v699 = vpop.permute.xlu0 %698
    %v700 = vlaneseq
    %v701 = vshrl.u32 %v700, 7
    %v702 = vsub.s32 %v134, %v701
    %v703 = vrot.slane %v696, %v702
    %v704 = vlaneseq
    %v705 = vshrl.u32 %v704, 7
    %v706 = vsub.s32 %v134, %v705
    %v707 = vrot.slane %v699, %v706
    %v708 = vsel %vm143, %v707, %v703
    %v710 = vsel %vm146, %v708, 0.0
    %711 = vadd.xlane.f32.xlu0 %v710
    %v712 = vpop.xlane.xlu0 %711
    %v715 = vmul.f32 %v696, %v646
    %v716 = vmul.f32 %v699, %v648
    %v717 = vrot.slane %v715, 4
    %v718 = vadd.f32 %v715, %v717
    %v719 = vrot.slane %v718, 2
    %v720 = vadd.f32 %v718, %v719
    %v721 = vrot.slane %v720, 1
    %v722 = vadd.f32 %v720, %v721
    %v723 = vrot.slane %v716, 4
    %v724 = vadd.f32 %v716, %v723
    %v725 = vrot.slane %v724, 2
    %v726 = vadd.f32 %v724, %v725
    %v727 = vrot.slane %v726, 1
    %v728 = vadd.f32 %v726, %v727
    %v729 = vrcp.pop %v712
    %v731 = vrot.slane %v729, 1
    %v734 = vmul.f32 %v722, %v729
    %v735 = vmul.f32 %v728, %v731
    %v736 = vmul.f32 %v647, %v215
    %v737 = vmul.f32 %v649, %v215
    %738 = vadd.xlane.f32.xlu0 %v736
    %v739 = vpop.xlane.xlu0 %738
    %740 = vadd.xlane.f32.xlu0 %v737
    %v741 = vpop.xlane.xlu0 %740
    %v742 = vmax.f32 %v739, 0.0
    %v743 = vmax.f32 %v741, 0.0
    %v744 = vmul.f32 %v742, %v225
    %v745 = vmul.f32 %v743, %v225
    %v748 = vlaneseq
    %v749 = vshrl.u32 %v748, 7
    %v750 = vsub.s32 %v134, %v749
    %v751 = vrot.slane %v744, %v750
    %v752 = vlaneseq
    %v753 = vshrl.u32 %v752, 7
    %v754 = vsub.s32 %v134, %v753
    %v755 = vrot.slane %v745, %v754
    %v756 = vsel %vm143, %v755, %v751
    %v758 = vsel %vm146, %v756, -inf
    %759 = vmax.xlane.f32.xlu0 %v758
    %v760 = vpop.xlane.xlu0 %759
    %v762 = vlaneseq
    %v763 = vshrl.u32 %v762, 7
    %v764 = vsub.s32 0, %v763
    %v765 = vrot.slane %v760, %v764
    %v766 = vlaneseq
    %v767 = vshrl.u32 %v766, 7
    %v768 = vsub.s32 1, %v767
    %v769 = vrot.slane %v760, %v768
    %v772 = vsub.f32 %v744, %v765
    %v773 = vsub.f32 %v745, %v769
    %v774 = vmul.f32 %v772, 1.442695
    %v775 = vpow.pop %v774
    %v776 = vmul.f32 %v773, 1.442695
    %v777 = vpow.pop %v776
    %780 = vset.pattern.permute.xlu0 0
    %781 = vperm.xlu0 %780, %v775
    %v782 = vpop.permute.xlu0 %781
    %783 = vset.pattern.permute.xlu0 0
    %784 = vperm.xlu0 %783, %v777
    %v785 = vpop.permute.xlu0 %784
    %v786 = vlaneseq
    %v787 = vshrl.u32 %v786, 7
    %v788 = vsub.s32 %v134, %v787
    %v789 = vrot.slane %v782, %v788
    %v790 = vlaneseq
    %v791 = vshrl.u32 %v790, 7
    %v792 = vsub.s32 %v134, %v791
    %v793 = vrot.slane %v785, %v792
    %v794 = vsel %vm143, %v793, %v789
    %v796 = vsel %vm146, %v794, 0.0
    %797 = vadd.xlane.f32.xlu0 %v796
    %v798 = vpop.xlane.xlu0 %797
    %v801 = vmul.f32 %v782, %v647
    %v802 = vmul.f32 %v785, %v649
    %v803 = vrot.slane %v801, 4
    %v804 = vadd.f32 %v801, %v803
    %v805 = vrot.slane %v804, 2
    %v806 = vadd.f32 %v804, %v805
    %v807 = vrot.slane %v806, 1
    %v808 = vadd.f32 %v806, %v807
    %v809 = vrot.slane %v802, 4
    %v810 = vadd.f32 %v802, %v809
    %v811 = vrot.slane %v810, 2
    %v812 = vadd.f32 %v810, %v811
    %v813 = vrot.slane %v812, 1
    %v814 = vadd.f32 %v812, %v813
    %v815 = vrcp.pop %v798
    %v817 = vrot.slane %v815, 1
    %v820 = vmul.f32 %v808, %v815
    %v821 = vmul.f32 %v814, %v817
    %v822 = vpack.c.bf16 %v209, %v209
    %v823 = vpack.c.bf16 %v210, %v210
    %v824 = vpack.c.bf16 %v507, %v507
    %v825 = vpack.c.bf16 %v508, %v508
    %v826 = vpack.c.bf16 %v734, %v734
    %v827 = vpack.c.bf16 %v735, %v735
    %v828 = vpack.c.bf16 %v302, %v302
    %v829 = vpack.c.bf16 %v303, %v303
    %v830 = vpack.c.bf16 %v593, %v593
    %v831 = vpack.c.bf16 %v594, %v594
    %v832 = vpack.c.bf16 %v820, %v820
    %v833 = vpack.c.bf16 %v821, %v821
    %v836 = vunpack.c.l.b16 %v822
    %v837 = vunpack.c.l.b16 %v823
    %v838 = vrot.slane %v837, 7
    %v839 = vsel %vm143, %v838, %v836
    %v840 = vpack.c.b16 %v839, %v839
    %v844 = vunpack.c.l.b16 %v824
    %v845 = vunpack.c.l.b16 %v825
    %v846 = vrot.slane %v845, 7
    %v847 = vsel %vm143, %v846, %v844
    %v848 = vpack.c.b16 %v847, %v847
    %v852 = vunpack.c.l.b16 %v826
    %v853 = vunpack.c.l.b16 %v827
    %v854 = vrot.slane %v853, 7
    %v855 = vsel %vm143, %v854, %v852
    %v856 = vpack.c.b16 %v855, %v855
    %v860 = vunpack.c.l.b16 %v828
    %v861 = vunpack.c.l.b16 %v829
    %v862 = vrot.slane %v861, 7
    %v863 = vsel %vm143, %v862, %v860
    %v864 = vpack.c.b16 %v863, %v863
    %v868 = vunpack.c.l.b16 %v830
    %v869 = vunpack.c.l.b16 %v831
    %v870 = vrot.slane %v869, 7
    %v871 = vsel %vm143, %v870, %v868
    %v872 = vpack.c.b16 %v871, %v871
    %v876 = vunpack.c.l.b16 %v832
    %v877 = vunpack.c.l.b16 %v833
    %v878 = vrot.slane %v877, 7
    %v879 = vsel %vm143, %v878, %v876
    %v880 = vpack.c.b16 %v879, %v879
    %v882 = vld [vmem:[#allocation9] sm:$0xf]
    %v883 = vld [vmem:[#allocation9 + $0x4] sm:$0xf]
    %v884 = vld [vmem:[#allocation9 + $0x8] sm:$0xf]
    %v885 = vld [vmem:[#allocation9 + $0xc] sm:$0xf]
    %v886 = vld [vmem:[#allocation9 + $0x10] sm:$0xf]
    %v887 = vld [vmem:[#allocation9 + $0x14] sm:$0xf]
    %v888 = vld [vmem:[#allocation9 + $0x18] sm:$0xf]
    %v889 = vld [vmem:[#allocation9 + $0x1c] sm:$0xf]
    %v890 = vld [vmem:[#allocation9 + $0x20] sm:$0xf]
    %v891 = vld [vmem:[#allocation9 + $0x24] sm:$0xf]
    %v892 = vld [vmem:[#allocation9 + $0x28] sm:$0xf]
    %v893 = vld [vmem:[#allocation9 + $0x2c] sm:$0xf]
    %v894 = vld [vmem:[#allocation9 + $0x30] sm:$0xf]
    %v895 = vld [vmem:[#allocation9 + $0x34] sm:$0xf]
    %v896 = vld [vmem:[#allocation9 + $0x38] sm:$0xf]
    %v897 = vld [vmem:[#allocation9 + $0x3c] sm:$0xf]
    %v898 = vld [vmem:[#allocation9 + $0x40] sm:$0xf]
    %v899 = vld [vmem:[#allocation9 + $0x44] sm:$0xf]
    %v900 = vld [vmem:[#allocation9 + $0x48] sm:$0xf]
    %v901 = vld [vmem:[#allocation9 + $0x4c] sm:$0xf]
    %v902 = vld [vmem:[#allocation9 + $0x50] sm:$0xf]
    %v903 = vld [vmem:[#allocation9 + $0x54] sm:$0xf]
    %v904 = vld [vmem:[#allocation9 + $0x58] sm:$0xf]
    %v905 = vld [vmem:[#allocation9 + $0x5c] sm:$0xf]
    %v906 = vld [vmem:[#allocation9 + $0x60] sm:$0xf]
    %v907 = vld [vmem:[#allocation9 + $0x64] sm:$0xf]
    %v908 = vld [vmem:[#allocation9 + $0x68] sm:$0xf]
    %v909 = vld [vmem:[#allocation9 + $0x6c] sm:$0xf]
    %v910 = vld [vmem:[#allocation9 + $0x70] sm:$0xf]
    %v911 = vld [vmem:[#allocation9 + $0x74] sm:$0xf]
    %v912 = vld [vmem:[#allocation9 + $0x78] sm:$0xf]
    %v913 = vld [vmem:[#allocation9 + $0x7c] sm:$0xf]
    %v914 = vld [vmem:[#allocation9 + $0x80] sm:$0xf]
    %v915 = vld [vmem:[#allocation9 + $0x84] sm:$0xf]
    %v916 = vld [vmem:[#allocation9 + $0x88] sm:$0xf]
    %v917 = vld [vmem:[#allocation9 + $0x8c] sm:$0xf]
    %v918 = vld [vmem:[#allocation9 + $0x90] sm:$0xf]
    %v919 = vld [vmem:[#allocation9 + $0x94] sm:$0xf]
    %v920 = vld [vmem:[#allocation9 + $0x98] sm:$0xf]
    %v921 = vld [vmem:[#allocation9 + $0x9c] sm:$0xf]
    %v922 = vld [vmem:[#allocation9 + $0xa0] sm:$0xf]
    %v923 = vld [vmem:[#allocation9 + $0xa4] sm:$0xf]
    %v924 = vld [vmem:[#allocation9 + $0xa8] sm:$0xf]
    %v925 = vld [vmem:[#allocation9 + $0xac] sm:$0xf]
    %v926 = vld [vmem:[#allocation9 + $0xb0] sm:$0xf]
    %v927 = vld [vmem:[#allocation9 + $0xb4] sm:$0xf]
    %v928 = vld [vmem:[#allocation9 + $0xb8] sm:$0xf]
    %v929 = vld [vmem:[#allocation9 + $0xbc] sm:$0xf]
    %v930 = vld [vmem:[#allocation9 + $0xc0] sm:$0xf]
    %v931 = vld [vmem:[#allocation9 + $0xc4] sm:$0xf]
    %v932 = vld [vmem:[#allocation9 + $0xc8] sm:$0xf]
    %v933 = vld [vmem:[#allocation9 + $0xcc] sm:$0xf]
    %v934 = vld [vmem:[#allocation9 + $0xd0] sm:$0xf]
    %v935 = vld [vmem:[#allocation9 + $0xd4] sm:$0xf]
    %v936 = vld [vmem:[#allocation9 + $0xd8] sm:$0xf]
    %v937 = vld [vmem:[#allocation9 + $0xdc] sm:$0xf]
    %v938 = vld [vmem:[#allocation9 + $0xe0] sm:$0xf]
    %v939 = vld [vmem:[#allocation9 + $0xe4] sm:$0xf]
    %v940 = vld [vmem:[#allocation9 + $0xe8] sm:$0xf]
    %v941 = vld [vmem:[#allocation9 + $0xec] sm:$0xf]
    %v942 = vld [vmem:[#allocation9 + $0xf0] sm:$0xf]
    %v943 = vld [vmem:[#allocation9 + $0xf4] sm:$0xf]
    %v944 = vld [vmem:[#allocation9 + $0xf8] sm:$0xf]
    %v945 = vld [vmem:[#allocation9 + $0xfc] sm:$0xf]
    %v946 = vld [vmem:[#allocation9 + $0x100] sm:$0xf]
    %v947 = vld [vmem:[#allocation9 + $0x104] sm:$0xf]
    %v948 = vld [vmem:[#allocation9 + $0x108] sm:$0xf]
    %v949 = vld [vmem:[#allocation9 + $0x10c] sm:$0xf]
    %v950 = vld [vmem:[#allocation9 + $0x110] sm:$0xf]
    %v951 = vld [vmem:[#allocation9 + $0x114] sm:$0xf]
    %v952 = vld [vmem:[#allocation9 + $0x118] sm:$0xf]
    %v953 = vld [vmem:[#allocation9 + $0x11c] sm:$0xf]
    %v954 = vld [vmem:[#allocation9 + $0x120] sm:$0xf]
    %v955 = vld [vmem:[#allocation9 + $0x124] sm:$0xf]
    %v956 = vld [vmem:[#allocation9 + $0x128] sm:$0xf]
    %v957 = vld [vmem:[#allocation9 + $0x12c] sm:$0xf]
    %v958 = vld [vmem:[#allocation9 + $0x130] sm:$0xf]
    %v959 = vld [vmem:[#allocation9 + $0x134] sm:$0xf]
    %v960 = vld [vmem:[#allocation9 + $0x138] sm:$0xf]
    %v961 = vld [vmem:[#allocation9 + $0x13c] sm:$0xf]
    %v962 = vld [vmem:[#allocation9 + $0x140] sm:$0xf]
    %v963 = vld [vmem:[#allocation9 + $0x144] sm:$0xf]
    %v964 = vld [vmem:[#allocation9 + $0x148] sm:$0xf]
    %v965 = vld [vmem:[#allocation9 + $0x14c] sm:$0xf]
    %v966 = vld [vmem:[#allocation9 + $0x150] sm:$0xf]
    %v967 = vld [vmem:[#allocation9 + $0x154] sm:$0xf]
    %v968 = vld [vmem:[#allocation9 + $0x158] sm:$0xf]
    %v969 = vld [vmem:[#allocation9 + $0x15c] sm:$0xf]
    %v970 = vld [vmem:[#allocation9 + $0x160] sm:$0xf]
    %v971 = vld [vmem:[#allocation9 + $0x164] sm:$0xf]
    %v972 = vld [vmem:[#allocation9 + $0x168] sm:$0xf]
    %v973 = vld [vmem:[#allocation9 + $0x16c] sm:$0xf]
    %v974 = vld [vmem:[#allocation9 + $0x170] sm:$0xf]
    %v975 = vld [vmem:[#allocation9 + $0x174] sm:$0xf]
    %v976 = vld [vmem:[#allocation9 + $0x178] sm:$0xf]
    %v977 = vld [vmem:[#allocation9 + $0x17c] sm:$0xf]
    %v978 = vld [vmem:[%s7] sm:$0x1]
    %v980 = vlaneseq
    %v981 = vshrl.u32 %v980, 7
    %v982 = vsub.s32 0, %v981
    %v983 = vrot.slane %v978, %v982
    %v1081 = vunpack.c.l.b16 %v882
    %v1082 = vunpack.c.l.b16 %v883
    %v1083 = vunpack.c.l.b16 %v884
    %v1084 = vunpack.c.l.b16 %v885
    %v1085 = vunpack.c.l.b16 %v886
    %v1086 = vunpack.c.l.b16 %v887
    %v1087 = vunpack.c.l.b16 %v888
    %v1088 = vunpack.c.l.b16 %v889
    %v1089 = vunpack.c.l.b16 %v890
    %v1090 = vunpack.c.l.b16 %v891
    %v1091 = vunpack.c.l.b16 %v892
    %v1092 = vunpack.c.l.b16 %v893
    %v1093 = vunpack.c.l.b16 %v894
    %v1094 = vunpack.c.l.b16 %v895
    %v1095 = vunpack.c.l.b16 %v896
    %v1096 = vunpack.c.l.b16 %v897
    %v1097 = vunpack.c.l.b16 %v898
    %v1098 = vunpack.c.l.b16 %v899
    %v1099 = vunpack.c.l.b16 %v900
    %v1100 = vunpack.c.l.b16 %v901
    %v1101 = vunpack.c.l.b16 %v902
    %v1102 = vunpack.c.l.b16 %v903
    %v1103 = vunpack.c.l.b16 %v904
    %v1104 = vunpack.c.l.b16 %v905
    %v1105 = vunpack.c.l.b16 %v906
    %v1106 = vunpack.c.l.b16 %v907
    %v1107 = vunpack.c.l.b16 %v908
    %v1108 = vunpack.c.l.b16 %v909
    %v1109 = vunpack.c.l.b16 %v910
    %v1110 = vunpack.c.l.b16 %v911
    %v1111 = vunpack.c.l.b16 %v912
    %v1112 = vunpack.c.l.b16 %v913
    %v1113 = vunpack.c.l.b16 %v914
    %v1114 = vunpack.c.l.b16 %v915
    %v1115 = vunpack.c.l.b16 %v916
    %v1116 = vunpack.c.l.b16 %v917
    %v1117 = vunpack.c.l.b16 %v918
    %v1118 = vunpack.c.l.b16 %v919
    %v1119 = vunpack.c.l.b16 %v920
    %v1120 = vunpack.c.l.b16 %v921
    %v1121 = vunpack.c.l.b16 %v922
    %v1122 = vunpack.c.l.b16 %v923
    %v1123 = vunpack.c.l.b16 %v924
    %v1124 = vunpack.c.l.b16 %v925
    %v1125 = vunpack.c.l.b16 %v926
    %v1126 = vunpack.c.l.b16 %v927
    %v1127 = vunpack.c.l.b16 %v928
    %v1128 = vunpack.c.l.b16 %v929
    %v1129 = vunpack.c.l.b16 %v930
    %v1130 = vunpack.c.l.b16 %v931
    %v1131 = vunpack.c.l.b16 %v932
    %v1132 = vunpack.c.l.b16 %v933
    %v1133 = vunpack.c.l.b16 %v934
    %v1134 = vunpack.c.l.b16 %v935
    %v1135 = vunpack.c.l.b16 %v936
    %v1136 = vunpack.c.l.b16 %v937
    %v1137 = vunpack.c.l.b16 %v938
    %v1138 = vunpack.c.l.b16 %v939
    %v1139 = vunpack.c.l.b16 %v940
    %v1140 = vunpack.c.l.b16 %v941
    %v1141 = vunpack.c.l.b16 %v942
    %v1142 = vunpack.c.l.b16 %v943
    %v1143 = vunpack.c.l.b16 %v944
    %v1144 = vunpack.c.l.b16 %v945
    %v1145 = vunpack.c.l.b16 %v946
    %v1146 = vunpack.c.l.b16 %v947
    %v1147 = vunpack.c.l.b16 %v948
    %v1148 = vunpack.c.l.b16 %v949
    %v1149 = vunpack.c.l.b16 %v950
    %v1150 = vunpack.c.l.b16 %v951
    %v1151 = vunpack.c.l.b16 %v952
    %v1152 = vunpack.c.l.b16 %v953
    %v1153 = vunpack.c.l.b16 %v954
    %v1154 = vunpack.c.l.b16 %v955
    %v1155 = vunpack.c.l.b16 %v956
    %v1156 = vunpack.c.l.b16 %v957
    %v1157 = vunpack.c.l.b16 %v958
    %v1158 = vunpack.c.l.b16 %v959
    %v1159 = vunpack.c.l.b16 %v960
    %v1160 = vunpack.c.l.b16 %v961
    %v1161 = vunpack.c.l.b16 %v962
    %v1162 = vunpack.c.l.b16 %v963
    %v1163 = vunpack.c.l.b16 %v964
    %v1164 = vunpack.c.l.b16 %v965
    %v1165 = vunpack.c.l.b16 %v966
    %v1166 = vunpack.c.l.b16 %v967
    %v1167 = vunpack.c.l.b16 %v968
    %v1168 = vunpack.c.l.b16 %v969
    %v1169 = vunpack.c.l.b16 %v970
    %v1170 = vunpack.c.l.b16 %v971
    %v1171 = vunpack.c.l.b16 %v972
    %v1172 = vunpack.c.l.b16 %v973
    %v1173 = vunpack.c.l.b16 %v974
    %v1174 = vunpack.c.l.b16 %v975
    %v1175 = vunpack.c.l.b16 %v976
    %v1176 = vunpack.c.l.b16 %v977
    %v1177 = vpack.c.b16 %v1082, %v1081
    %v1178 = vpack.c.b16 %v1084, %v1083
    %v1179 = vpack.c.b16 %v1086, %v1085
    %v1180 = vpack.c.b16 %v1088, %v1087
    %v1181 = vpack.c.b16 %v1090, %v1089
    %v1182 = vpack.c.b16 %v1092, %v1091
    %v1183 = vpack.c.b16 %v1094, %v1093
    %v1184 = vpack.c.b16 %v1096, %v1095
    %v1185 = vpack.c.b16 %v1098, %v1097
    %v1186 = vpack.c.b16 %v1100, %v1099
    %v1187 = vpack.c.b16 %v1102, %v1101
    %v1188 = vpack.c.b16 %v1104, %v1103
    %v1189 = vpack.c.b16 %v1106, %v1105
    %v1190 = vpack.c.b16 %v1108, %v1107
    %v1191 = vpack.c.b16 %v1110, %v1109
    %v1192 = vpack.c.b16 %v1112, %v1111
    %v1193 = vpack.c.b16 %v1114, %v1113
    %v1194 = vpack.c.b16 %v1116, %v1115
    %v1195 = vpack.c.b16 %v1118, %v1117
    %v1196 = vpack.c.b16 %v1120, %v1119
    %v1197 = vpack.c.b16 %v1122, %v1121
    %v1198 = vpack.c.b16 %v1124, %v1123
    %v1199 = vpack.c.b16 %v1126, %v1125
    %v1200 = vpack.c.b16 %v1128, %v1127
    %v1201 = vpack.c.b16 %v1130, %v1129
    %v1202 = vpack.c.b16 %v1132, %v1131
    %v1203 = vpack.c.b16 %v1134, %v1133
    %v1204 = vpack.c.b16 %v1136, %v1135
    %v1205 = vpack.c.b16 %v1138, %v1137
    %v1206 = vpack.c.b16 %v1140, %v1139
    %v1207 = vpack.c.b16 %v1142, %v1141
    %v1208 = vpack.c.b16 %v1144, %v1143
    %v1209 = vpack.c.b16 %v1146, %v1145
    %v1210 = vpack.c.b16 %v1148, %v1147
    %v1211 = vpack.c.b16 %v1150, %v1149
    %v1212 = vpack.c.b16 %v1152, %v1151
    %v1213 = vpack.c.b16 %v1154, %v1153
    %v1214 = vpack.c.b16 %v1156, %v1155
    %v1215 = vpack.c.b16 %v1158, %v1157
    %v1216 = vpack.c.b16 %v1160, %v1159
    %v1217 = vpack.c.b16 %v1162, %v1161
    %v1218 = vpack.c.b16 %v1164, %v1163
    %v1219 = vpack.c.b16 %v1166, %v1165
    %v1220 = vpack.c.b16 %v1168, %v1167
    %v1221 = vpack.c.b16 %v1170, %v1169
    %v1222 = vpack.c.b16 %v1172, %v1171
    %v1223 = vpack.c.b16 %v1174, %v1173
    %v1224 = vpack.c.b16 %v1176, %v1175
    %1273 = vmatprep.subr.bf16.mxu0 0
    %1274 = vmatpush1.bf16.msra.mxu0 %v1177
    %1275 = vmatprep.subr.bf16.mxu0 0
    %1276 = vmatpush1.bf16.msra.mxu0 %v1178
    %1277 = vmatprep.subr.bf16.mxu0 0
    %1278 = vmatpush1.bf16.msra.mxu0 %v1179
    %1279 = vmatprep.subr.bf16.mxu0 0
    %1280 = vmatpush1.bf16.msra.mxu0 %v1180
    %1281 = vmatprep.subr.bf16.mxu0 0
    %1282 = vmatpush1.bf16.msra.mxu0 %v1181
    %1283 = vmatprep.subr.bf16.mxu0 0
    %1284 = vmatpush1.bf16.msra.mxu0 %v1182
    %1285 = vmatprep.subr.bf16.mxu0 0
    %1286 = vmatpush1.bf16.msra.mxu0 %v1183
    %1287 = vmatprep.subr.bf16.mxu0 0
    %1288 = vmatpush1.bf16.msra.mxu0 %v1184
    %1289 = vmatprep.subr.bf16.mxu0 0
    %1290 = vmatpush1.bf16.msra.mxu0 %v1185
    %1291 = vmatprep.subr.bf16.mxu0 0
    %1292 = vmatpush1.bf16.msra.mxu0 %v1186
    %1293 = vmatprep.subr.bf16.mxu0 0
    %1294 = vmatpush1.bf16.msra.mxu0 %v1187
    %1295 = vmatprep.subr.bf16.mxu0 0
    %1296 = vmatpush1.bf16.msra.mxu0 %v1188
    %1297 = vmatprep.subr.bf16.mxu0 0
    %1298 = vmatpush1.bf16.msra.mxu0 %v1189
    %1299 = vmatprep.subr.bf16.mxu0 0
    %1300 = vmatpush1.bf16.msra.mxu0 %v1190
    %1301 = vmatprep.subr.bf16.mxu0 0
    %1302 = vmatpush1.bf16.msra.mxu0 %v1191
    %1303 = vmatprep.subr.bf16.mxu0 0
    %1304 = vmatpush1.bf16.msra.mxu0 %v1192
    %1305 = vmatprep.mubr.bf16.mxu0 %v848
    %1306 = vmatmul.mubr.bf16.gmra.mrb[0].mxu0 %v840
    %v1307 = vpop.f32.mrb[0].mxu0
    %v1308 = vadd.f32 %v983, %v1307
    %v1309 = vpop.f32.mrb[0].mxu0
    %v1310 = vpop.f32.mrb[0].mxu0
    %v1311 = vpop.f32.mrb[0].mxu0
    %1312 = vdwg.mxu0
    %1313 = vmatprep.subr.bf16.mxu0 0
    %1314 = vmatpush1.bf16.msra.mxu0 %v1193
    %1315 = vmatprep.subr.bf16.mxu0 0
    %1316 = vmatpush1.bf16.msra.mxu0 %v1194
    %1317 = vmatprep.subr.bf16.mxu0 0
    %1318 = vmatpush1.bf16.msra.mxu0 %v1195
    %1319 = vmatprep.subr.bf16.mxu0 0
    %1320 = vmatpush1.bf16.msra.mxu0 %v1196
    %1321 = vmatprep.subr.bf16.mxu0 0
    %1322 = vmatpush1.bf16.msra.mxu0 %v1197
    %1323 = vmatprep.subr.bf16.mxu0 0
    %1324 = vmatpush1.bf16.msra.mxu0 %v1198
    %1325 = vmatprep.subr.bf16.mxu0 0
    %1326 = vmatpush1.bf16.msra.mxu0 %v1199
    %1327 = vmatprep.subr.bf16.mxu0 0
    %1328 = vmatpush1.bf16.msra.mxu0 %v1200
    %1329 = vmatprep.subr.bf16.mxu0 0
    %1330 = vmatpush1.bf16.msra.mxu0 %v1201
    %1331 = vmatprep.subr.bf16.mxu0 0
    %1332 = vmatpush1.bf16.msra.mxu0 %v1202
    %1333 = vmatprep.subr.bf16.mxu0 0
    %1334 = vmatpush1.bf16.msra.mxu0 %v1203
    %1335 = vmatprep.subr.bf16.mxu0 0
    %1336 = vmatpush1.bf16.msra.mxu0 %v1204
    %1337 = vmatprep.subr.bf16.mxu0 0
    %1338 = vmatpush1.bf16.msra.mxu0 %v1205
    %1339 = vmatprep.subr.bf16.mxu0 0
    %1340 = vmatpush1.bf16.msra.mxu0 %v1206
    %1341 = vmatprep.subr.bf16.mxu0 0
    %1342 = vmatpush1.bf16.msra.mxu0 %v1207
    %1343 = vmatprep.subr.bf16.mxu0 0
    %1344 = vmatpush1.bf16.msra.mxu0 %v1208
    %1345 = vmatprep.mubr.bf16.mxu0 %v864
    %1346 = vmatmul.mubr.bf16.gmra.mrb[0].mxu0 %v856
    %v1347 = vpop.f32.mrb[0].mxu0
    %v1348 = vadd.f32 %v1308, %v1347
    %v1349 = vpop.f32.mrb[0].mxu0
    %v1350 = vpop.f32.mrb[0].mxu0
    %v1351 = vpop.f32.mrb[0].mxu0
    %1352 = vdwg.mxu0
    %1353 = vmatprep.subr.bf16.mxu0 0
    %1354 = vmatpush1.bf16.msra.mxu0 %v1209
    %1355 = vmatprep.subr.bf16.mxu0 0
    %1356 = vmatpush1.bf16.msra.mxu0 %v1210
    %1357 = vmatprep.subr.bf16.mxu0 0
    %1358 = vmatpush1.bf16.msra.mxu0 %v1211
    %1359 = vmatprep.subr.bf16.mxu0 0
    %1360 = vmatpush1.bf16.msra.mxu0 %v1212
    %1361 = vmatprep.subr.bf16.mxu0 0
    %1362 = vmatpush1.bf16.msra.mxu0 %v1213
    %1363 = vmatprep.subr.bf16.mxu0 0
    %1364 = vmatpush1.bf16.msra.mxu0 %v1214
    %1365 = vmatprep.subr.bf16.mxu0 0
    %1366 = vmatpush1.bf16.msra.mxu0 %v1215
    %1367 = vmatprep.subr.bf16.mxu0 0
    %1368 = vmatpush1.bf16.msra.mxu0 %v1216
    %1369 = vmatprep.subr.bf16.mxu0 0
    %1370 = vmatpush1.bf16.msra.mxu0 %v1217
    %1371 = vmatprep.subr.bf16.mxu0 0
    %1372 = vmatpush1.bf16.msra.mxu0 %v1218
    %1373 = vmatprep.subr.bf16.mxu0 0
    %1374 = vmatpush1.bf16.msra.mxu0 %v1219
    %1375 = vmatprep.subr.bf16.mxu0 0
    %1376 = vmatpush1.bf16.msra.mxu0 %v1220
    %1377 = vmatprep.subr.bf16.mxu0 0
    %1378 = vmatpush1.bf16.msra.mxu0 %v1221
    %1379 = vmatprep.subr.bf16.mxu0 0
    %1380 = vmatpush1.bf16.msra.mxu0 %v1222
    %1381 = vmatprep.subr.bf16.mxu0 0
    %1382 = vmatpush1.bf16.msra.mxu0 %v1223
    %1383 = vmatprep.subr.bf16.mxu0 0
    %1384 = vmatpush1.bf16.msra.mxu0 %v1224
    %1385 = vmatprep.mubr.bf16.mxu0 %v880
    %1386 = vmatmul.mubr.bf16.gmra.mrb[0].mxu0 %v872
    %v1387 = vpop.f32.mrb[0].mxu0
    %v1388 = vadd.f32 %v1348, %v1387
    %v1389 = vpop.f32.mrb[0].mxu0
    %v1390 = vpop.f32.mrb[0].mxu0
    %v1391 = vpop.f32.mrb[0].mxu0
    %1392 = vdwg.mxu0
    %1393 = vst [vmem:[#allocation10] sm:$0x3] %v1388
    // Predicated region
    $region50: #{tpu_custom_call.1} parent=1 // pred_check
      _
    $region51: #{tpu_custom_call.1} parent=1 // pred_check_branch
      %1395 = sbr.rel (0) target = $region53
    $region52: #{tpu_custom_call.1} parent=1 // pred_region
      %s1397 = ssub.s32 32, 32
      %1398 = vsyncadd [#allocation4], %s1397
      %s1400 = sshll.u32 [#allocation10], 4
      %s1401 = int_to_ptr.vmem [resolvable:$true] %s1400
      %1403 = dma.vmem_to_hbm [thread:$0]  %s1401, 32, %s8, [#allocation4]
    $region53: #{tpu_custom_call.1} parent=1 // pred_fallthru
      _
    // Predicated region
    $region54: #{tpu_custom_call.1} parent=1 // pred_check
      _
    $region55: #{tpu_custom_call.1} parent=1 // pred_check_branch
      %1405 = sbr.rel (0) target = $region57
    $region56: #{tpu_custom_call.1} parent=1 // pred_region
      %1406 = dma.done [#allocation4], 32
    $region57: #{tpu_custom_call.1} parent=1 // pred_fallthru
      _
    %1407 = vsyncpa [#allocation3], 1
    %1408 = vsyncpa [#allocation8], 1
    %1409 = vsyncpa [#allocation4], 1
    %1410 = vsyncpa [#allocation5], 1

</llo_original>
